<compile_context>
chip_gen: v5e
topology: v5e:2x2
jax: 0.10.0
libtpu: 0.0.40
codegen_flags: <defaults>
</compile_context>

<pallas_src>
import functools

import jax
import jax.numpy as jnp
import numpy as np
from jax.experimental import pallas as pl
from jax.experimental.pallas import tpu as pltpu


def _self_attention_kernel(x_ref, bias_ref, lnw_ref, lnb_ref,
                           wqkv_ref, wo_ref, bout_ref,
                           o_ref, acc_ref, *, heads, dim_head, d_actual):
    # x_ref: (Bt, N, Dp) block of the zero-padded (B, N, Dp) input.
    Bt, N, Dp = x_ref.shape
    dh = dim_head

    x = x_ref[...].astype(jnp.float32)                        # (Bt, N, Dp)

    # ---- LayerNorm (eps=1e-5, biased variance, affine), f32 ----
    # Padded lanes are zero, so plain sums are already the sums over the real
    # d_actual lanes; E[x^2]-mean^2 keeps the padding out of the variance.
    inv_d = jnp.float32(1.0 / d_actual)
    mean = jnp.sum(x, axis=-1, keepdims=True) * inv_d
    ex2 = jnp.sum(x * x, axis=-1, keepdims=True) * inv_d
    var = ex2 - mean * mean
    xn = (x - mean) * jax.lax.rsqrt(var + 1e-5)
    # Zero-padded ln_w / ln_b zero out the padded lanes again.
    xn = xn * lnw_ref[0].astype(jnp.float32) + lnb_ref[0].astype(jnp.float32)

    xn2 = xn.astype(jnp.bfloat16).reshape(Bt * N, Dp)          # bf16 MXU feed
    bias = bias_ref[...].astype(jnp.float32)                   # (Bt, 1, N) additive mask

    acc_ref[...] = jnp.zeros_like(acc_ref)                     # output-proj accumulator

    for h in range(heads):                                     # static, small unroll
        # Fused per-head QKV projection: ONE matmul of width 3*dh per head
        # (scale already folded into the q columns in the wrapper).
        qkv_h = jnp.dot(xn2, wqkv_ref[h], preferred_element_type=jnp.float32)
        q3 = qkv_h[:, 0 * dh:1 * dh].astype(jnp.bfloat16).reshape(Bt, N, dh)
        k3 = qkv_h[:, 1 * dh:2 * dh].astype(jnp.bfloat16).reshape(Bt, N, dh)
        v3 = qkv_h[:, 2 * dh:3 * dh].astype(jnp.bfloat16).reshape(Bt, N, dh)

        # sim: (Bt, N, N); batched matmul on the MXU, f32 accumulate.
        sim = jnp.einsum("bik,bjk->bij", q3, k3,
                         preferred_element_type=jnp.float32)
        sim = sim + bias                                       # broadcast over queries

        # Softmax in f32, normalization deferred to the (N, dh) tensor.
        m = jnp.max(sim, axis=-1, keepdims=True)
        p = jnp.exp(sim - m)                                   # unnormalized probs
        l = jnp.sum(p, axis=-1, keepdims=True)

        out_h = jnp.einsum("bij,bjk->bik", p.astype(jnp.bfloat16), v3,
                           preferred_element_type=jnp.float32)  # (Bt, N, dh)
        out_h = out_h * pl.reciprocal(l, approx=True)          # EUP reciprocal

        # Output projection accumulated per head into VMEM scratch.
        acc_ref[...] += jnp.dot(out_h.astype(jnp.bfloat16).reshape(Bt * N, dh),
                                wo_ref[h], preferred_element_type=jnp.float32)

    y = acc_ref[...] + bout_ref[0].astype(jnp.float32)
    o_ref[...] = y.reshape(Bt, N, Dp).astype(o_ref.dtype)


def _block_vmem_bytes(bb, n, d_pad, heads, dim_head):
    """Rough per-grid-step VMEM estimate (bytes) for the kernel above."""
    f32, bf16, lane = 4, 2, 128
    dh_l = max(dim_head, lane)                        # lane-padded footprint
    io = 2 * 2 * bb * n * d_pad * f32                 # x + out blocks, double-buffered
    ln = 3 * bb * n * d_pad * f32                     # x, xn (f32) + xn2 slab
    per_head = (bb * n * 3 * dh_l * f32               # qkv_h
                + 3 * bb * n * dh_l * bf16            # q3 / k3 / v3
                + 3 * bb * n * max(n, lane) * f32     # sim, p (+ bf16 copy)
                + 2 * bb * n * dh_l * f32)            # out_h
    weights = 2 * 2 * heads * (d_pad * 3 * dim_head + dim_head * d_pad) * bf16
    acc = bb * n * d_pad * f32
    return io + ln + per_head + weights + acc + (2 << 20)


def self_attention(x, params, *, heads, dim_head, mask=None, block_b=None):
    """x: (B, N, D) float32. mask: optional bool (B, N); True = keep."""
    B, N, D = x.shape
    inner = heads * dim_head
    scale = dim_head ** -0.5
    d_pad = ((D + 127) // 128) * 128                  # lane-dense feature dim

    # ---- VMEM capacity (for block_b cap and vmem_limit) ----
    try:
        vmem_cap = int(getattr(pltpu.get_tpu_info(), "vmem_capacity_bytes",
                               64 * 1024 * 1024))
    except Exception:
        vmem_cap = 64 * 1024 * 1024

    # ---- block_b: largest divisor of B that fits VMEM AND keeps >= 2 grid steps ----
    if block_b is None:
        budget = int(0.6 * vmem_cap)
        block_b = 1
        for cand in range(1, B + 1):
            if B % cand:
                continue
            if B >= 2 and B // cand < 2:              # keep >=2 steps (2 TCs + pipeline)
                continue
            if _block_vmem_bytes(cand, N, d_pad, heads, dim_head) <= budget:
                block_b = cand
    assert B % block_b == 0, "block_b must divide B"

    est = _block_vmem_bytes(block_b, N, d_pad, heads, dim_head)
    vmem_limit = int(min(0.9 * vmem_cap, max(32 * 1024 * 1024, 1.5 * est)))

    # ---- additive mask bias, computed once in the wrapper ----
    if mask is None:
        bias = jnp.zeros((B, 1, N), jnp.float32)
    else:
        bias = jnp.where(mask.reshape(B, 1, N), 0.0, -1e30).astype(jnp.float32)

    # ---- weight restructuring / padding (wrapper side, free) ----
    # w_qkv: (D, 3*inner); columns ordered (chunk={q,k,v}, head, dim_head).
    w_r = params["w_qkv"].astype(jnp.float32).reshape(D, 3, heads, dim_head)
    w_r = jnp.stack([w_r[:, 0] * scale, w_r[:, 1], w_r[:, 2]], axis=1)   # fold scale into Wq
    wqkv = jnp.transpose(w_r, (2, 0, 1, 3)).reshape(heads, D, 3 * dim_head)
    wqkv = jnp.pad(wqkv, ((0, 0), (0, d_pad - D), (0, 0))).astype(jnp.bfloat16)

    wo = params["w_out"].astype(jnp.float32).reshape(heads, dim_head, D)
    wo = jnp.pad(wo, ((0, 0), (0, 0), (0, d_pad - D))).astype(jnp.bfloat16)

    ln_w = jnp.pad(params["ln_w"].astype(jnp.float32), (0, d_pad - D)).reshape(1, d_pad)
    ln_b = jnp.pad(params["ln_b"].astype(jnp.float32), (0, d_pad - D)).reshape(1, d_pad)
    b_out = jnp.pad(params["b_out"].astype(jnp.float32), (0, d_pad - D)).reshape(1, d_pad)

    x_pad = jnp.pad(x, ((0, 0), (0, 0), (0, d_pad - D)))

    kernel = functools.partial(_self_attention_kernel,
                               heads=heads, dim_head=dim_head, d_actual=D)

    out_pad = pl.pallas_call(
        kernel,
        out_shape=jax.ShapeDtypeStruct((B, N, d_pad), x.dtype),
        grid_spec=pltpu.PrefetchScalarGridSpec(
            num_scalar_prefetch=0,
            grid=(B // block_b,),
            in_specs=[
                pl.BlockSpec((block_b, N, d_pad), lambda b: (b, 0, 0)),          # x (padded)
                pl.BlockSpec((block_b, 1, N), lambda b: (b, 0, 0)),              # mask bias
                pl.BlockSpec((1, d_pad), lambda b: (0, 0)),                      # ln weight
                pl.BlockSpec((1, d_pad), lambda b: (0, 0)),                      # ln bias
                pl.BlockSpec((heads, d_pad, 3 * dim_head), lambda b: (0, 0, 0)), # Wqkv (scaled)
                pl.BlockSpec((heads, dim_head, d_pad), lambda b: (0, 0, 0)),     # Wout
                pl.BlockSpec((1, d_pad), lambda b: (0, 0)),                      # b_out
            ],
            out_specs=pl.BlockSpec((block_b, N, d_pad), lambda b: (b, 0, 0)),
            scratch_shapes=[pltpu.VMEM((block_b * N, d_pad), jnp.float32)],
        ),
        compiler_params=pltpu.CompilerParams(
            dimension_semantics=("parallel",),
            vmem_limit_bytes=vmem_limit,
        ),
    )(x_pad, bias, ln_w, ln_b, wqkv, wo, b_out)

    return out_pad[..., :D]                                   # strip lane padding


def _reference(x, params, *, heads, dim_head, mask=None):
    # Pure-JAX reference reproducing the PyTorch forward exactly (f32 throughout).
    scale = dim_head ** -0.5
    mean = jnp.mean(x, -1, keepdims=True)
    var = jnp.mean((x - mean) ** 2, -1, keepdims=True)
    xn = (x - mean) / jnp.sqrt(var + 1e-5) * params["ln_w"] + params["ln_b"]
    qkv = xn @ params["w_qkv"]
    q, k, v = jnp.split(qkv, 3, axis=-1)
    q = q * scale

    def split_heads(t):
        b, n, _ = t.shape
        return t.reshape(b, n, heads, dim_head).transpose(0, 2, 1, 3)

    q, k, v = map(split_heads, (q, k, v))
    sim = jnp.einsum("bhid,bhjd->bhij", q, k)
    if mask is not None:
        sim = jnp.where(mask[:, None, None, :], sim, -jnp.finfo(sim.dtype).max)
    attn = jax.nn.softmax(sim, axis=-1)
    out = jnp.einsum("bhij,bhjd->bhid", attn, v)
    b, h, n, d = out.shape
    out = out.transpose(0, 2, 1, 3).reshape(b, n, h * d)
    return out @ params["w_out"] + params["b_out"]


if __name__ == "__main__":
    # Small shapes consistent with the module: dim=32, heads=4, dim_head=16.
    B, N, D = 2, 8, 32
    heads, dim_head = 4, 16
    inner = heads * dim_head

    key = jax.random.PRNGKey(0)
    kx, k1, k2, k3 = jax.random.split(key, 4)

    x = jax.random.normal(kx, (B, N, D), dtype=jnp.float32)

    params = {
        "ln_w": jnp.ones((D,), jnp.float32),
        "ln_b": jnp.zeros((D,), jnp.float32),
        "w_qkv": jax.random.normal(k1, (D, 3 * inner), jnp.float32) * 0.05,
        "w_out": jax.random.normal(k2, (inner, D), jnp.float32) * 0.05,
        "b_out": jax.random.normal(k3, (D,), jnp.float32) * 0.05,
    }

    # bf16 MXU feeds + approx reciprocal -> compare against the f32 reference
    # at bf16-level tolerance.
    out = jax.block_until_ready(
        self_attention(x, params, heads=heads, dim_head=dim_head, mask=None))
    ref = _reference(x, params, heads=heads, dim_head=dim_head, mask=None)
    np.testing.assert_allclose(np.asarray(out), np.asarray(ref), rtol=2e-2, atol=2e-2)

    # Also exercise the masked path.
    mask = jnp.array([[True] * 6 + [False] * 2, [True] * 8], dtype=bool)
    out_m = jax.block_until_ready(
        self_attention(x, params, heads=heads, dim_head=dim_head, mask=mask))
    ref_m = _reference(x, params, heads=heads, dim_head=dim_head, mask=mask)
    np.testing.assert_allclose(np.asarray(out_m), np.asarray(ref_m), rtol=2e-2, atol=2e-2)

    print("KERNEL_OK")
</pallas_src>

<mosaic_0001>
module attributes {stable_mosaic.version = 11 : i64} {
  func.func @_self_attention_kernel(%arg0: i32, %arg1: memref<1x8x128xf32, #tpu.memory_space<vmem>>, %arg2: memref<1x1x8xf32, #tpu.memory_space<vmem>>, %arg3: memref<1x128xf32, #tpu.memory_space<vmem>>, %arg4: memref<1x128xf32, #tpu.memory_space<vmem>>, %arg5: memref<4x128x48xbf16, #tpu.memory_space<vmem>>, %arg6: memref<4x16x128xbf16, #tpu.memory_space<vmem>>, %arg7: memref<1x128xf32, #tpu.memory_space<vmem>>, %arg8: memref<1x8x128xf32, #tpu.memory_space<vmem>>, %arg9: memref<8x128xf32, #tpu.memory_space<vmem>>) attributes {dimension_semantics = [#tpu.dimension_semantics<parallel>], iteration_bounds = array<i64: 2>, scalar_prefetch = 0 : i64, scratch_operands = 1 : i64, tpu.core_type = #tpu.core_type<tc>, window_params = [{transform_indices = @transform_0, window_bounds = array<i64: 1, 8, 128>}, {transform_indices = @transform_1, window_bounds = array<i64: 1, 1, 8>}, {pipeline_mode = #tpu.pipeline_mode<synchronous>, transform_indices = @transform_2, window_bounds = array<i64: 1, 128>}, {pipeline_mode = #tpu.pipeline_mode<synchronous>, transform_indices = @transform_3, window_bounds = array<i64: 1, 128>}, {pipeline_mode = #tpu.pipeline_mode<synchronous>, transform_indices = @transform_4, window_bounds = array<i64: 4, 128, 48>}, {pipeline_mode = #tpu.pipeline_mode<synchronous>, transform_indices = @transform_5, window_bounds = array<i64: 4, 16, 128>}, {pipeline_mode = #tpu.pipeline_mode<synchronous>, transform_indices = @transform_6, window_bounds = array<i64: 1, 128>}, {transform_indices = @transform_7, window_bounds = array<i64: 1, 8, 128>}]} {
    %c0 = arith.constant 0 : index
    %c0_0 = arith.constant 0 : index
    %c0_1 = arith.constant 0 : index
    %0 = vector.load %arg1[%c0, %c0_0, %c0_1] : memref<1x8x128xf32, #tpu.memory_space<vmem>>, vector<1x8x128xf32>
    %cst = arith.constant dense<0.000000e+00> : vector<1x8xf32>
    %1 = vector.multi_reduction <add>, %0, %cst [2] : vector<1x8x128xf32> to vector<1x8xf32>
    %2 = vector.shape_cast %1 : vector<1x8xf32> to vector<1x8x1xf32>
    %cst_2 = arith.constant 3.125000e-02 : f32
    %3 = vector.broadcast %cst_2 : f32 to vector<1x8x1xf32>
    %4 = arith.mulf %2, %3 : vector<1x8x1xf32>
    %5 = arith.mulf %0, %0 : vector<1x8x128xf32>
    %cst_3 = arith.constant dense<0.000000e+00> : vector<1x8xf32>
    %6 = vector.multi_reduction <add>, %5, %cst_3 [2] : vector<1x8x128xf32> to vector<1x8xf32>
    %7 = vector.shape_cast %6 : vector<1x8xf32> to vector<1x8x1xf32>
    %cst_4 = arith.constant 3.125000e-02 : f32
    %8 = vector.broadcast %cst_4 : f32 to vector<1x8x1xf32>
    %9 = arith.mulf %7, %8 : vector<1x8x1xf32>
    %10 = arith.mulf %4, %4 : vector<1x8x1xf32>
    %11 = arith.subf %9, %10 : vector<1x8x1xf32>
    %12 = vector.broadcast %4 : vector<1x8x1xf32> to vector<1x8x128xf32>
    %13 = arith.subf %0, %12 : vector<1x8x128xf32>
    %cst_5 = arith.constant 9.99999974E-6 : f32
    %14 = vector.broadcast %cst_5 : f32 to vector<1x8x1xf32>
    %15 = arith.addf %11, %14 : vector<1x8x1xf32>
    %16 = math.rsqrt %15 : vector<1x8x1xf32>
    %17 = vector.broadcast %16 : vector<1x8x1xf32> to vector<1x8x128xf32>
    %18 = arith.mulf %13, %17 : vector<1x8x128xf32>
    %c0_6 = arith.constant 0 : index
    %c0_7 = arith.constant 0 : index
    %19 = vector.load %arg3[%c0_6, %c0_7] : memref<1x128xf32, #tpu.memory_space<vmem>>, vector<1x128xf32>
    %20 = vector.shape_cast %19 : vector<1x128xf32> to vector<128xf32>
    %21 = vector.shape_cast %20 : vector<128xf32> to vector<1x1x128xf32>
    %22 = vector.broadcast %21 : vector<1x1x128xf32> to vector<1x8x128xf32>
    %23 = arith.mulf %18, %22 : vector<1x8x128xf32>
    %c0_8 = arith.constant 0 : index
    %c0_9 = arith.constant 0 : index
    %24 = vector.load %arg4[%c0_8, %c0_9] : memref<1x128xf32, #tpu.memory_space<vmem>>, vector<1x128xf32>
    %25 = vector.shape_cast %24 : vector<1x128xf32> to vector<128xf32>
    %26 = vector.shape_cast %25 : vector<128xf32> to vector<1x1x128xf32>
    %27 = vector.broadcast %26 : vector<1x1x128xf32> to vector<1x8x128xf32>
    %28 = arith.addf %23, %27 : vector<1x8x128xf32>
    %29 = arith.truncf %28 : vector<1x8x128xf32> to vector<1x8x128xbf16>
    %30 = vector.shape_cast %29 : vector<1x8x128xbf16> to vector<8x128xbf16>
    %c0_10 = arith.constant 0 : index
    %c0_11 = arith.constant 0 : index
    %c0_12 = arith.constant 0 : index
    %31 = vector.load %arg2[%c0_10, %c0_11, %c0_12] : memref<1x1x8xf32, #tpu.memory_space<vmem>>, vector<1x1x8xf32>
    %cst_13 = arith.constant 0.000000e+00 : f32
    %32 = vector.broadcast %cst_13 : f32 to vector<8x128xf32>
    %c0_14 = arith.constant 0 : index
    %c0_15 = arith.constant 0 : index
    %33 = vector.load %arg9[%c0_14, %c0_15] : memref<8x128xf32, #tpu.memory_space<vmem>>, vector<8x128xf32>
    tpu.vector_store %arg9[%c0_14, %c0_15], %32 {strides = array<i32>} : memref<8x128xf32, #tpu.memory_space<vmem>>, vector<8x128xf32>,
    %c0_16 = arith.constant 0 : index
    %c0_17 = arith.constant 0 : index
    %c0_18 = arith.constant 0 : index
    %34 = vector.load %arg5[%c0_16, %c0_17, %c0_18] : memref<4x128x48xbf16, #tpu.memory_space<vmem>>, vector<1x128x48xbf16>
    %35 = vector.shape_cast %34 : vector<1x128x48xbf16> to vector<128x48xbf16>
    %cst_19 = arith.constant dense<0.000000e+00> : vector<8x48xf32>
    %36 = tpu.matmul %30, %35, %cst_19 {dimension_numbers = #tpu.dot_dimension_numbers<[1], [0], [0], [1], [0, 0, 1, 1], [], []>} : vector<8x128xbf16>, vector<128x48xbf16>, vector<8x48xf32> -> vector<8x48xf32>
    %37 = vector.extract_strided_slice %36 {offsets = [0, 0], sizes = [8, 16], strides = [1, 1]} : vector<8x48xf32> to vector<8x16xf32>
    %38 = arith.truncf %37 : vector<8x16xf32> to vector<8x16xbf16>
    %39 = vector.shape_cast %38 : vector<8x16xbf16> to vector<1x8x16xbf16>
    %40 = vector.extract_strided_slice %36 {offsets = [0, 16], sizes = [8, 16], strides = [1, 1]} : vector<8x48xf32> to vector<8x16xf32>
    %41 = arith.truncf %40 : vector<8x16xf32> to vector<8x16xbf16>
    %42 = vector.shape_cast %41 : vector<8x16xbf16> to vector<1x8x16xbf16>
    %43 = vector.extract_strided_slice %36 {offsets = [0, 32], sizes = [8, 16], strides = [1, 1]} : vector<8x48xf32> to vector<8x16xf32>
    %44 = arith.truncf %43 : vector<8x16xf32> to vector<8x16xbf16>
    %45 = vector.shape_cast %44 : vector<8x16xbf16> to vector<1x8x16xbf16>
    "tpu.trace_start"() <{level = 10 : i32, message = "bik,bjk->bij"}> : () -> ()
    %cst_20 = arith.constant dense<0.000000e+00> : vector<1x8x8xf32>
    %46 = tpu.matmul %39, %42, %cst_20 {dimension_numbers = #tpu.dot_dimension_numbers<[2], [2], [1], [1], [0, 0, 0, 1, 1, 1], [0], [0]>} : vector<1x8x16xbf16>, vector<1x8x16xbf16>, vector<1x8x8xf32> -> vector<1x8x8xf32>
    "tpu.trace_stop"() : () -> ()
    %47 = vector.broadcast %31 : vector<1x1x8xf32> to vector<1x8x8xf32>
    %48 = arith.addf %46, %47 : vector<1x8x8xf32>
    %cst_21 = arith.constant dense<0xFF800000> : vector<1x8xf32>
    %49 = vector.multi_reduction <maximumf>, %48, %cst_21 [2] : vector<1x8x8xf32> to vector<1x8xf32>
    %50 = vector.shape_cast %49 : vector<1x8xf32> to vector<1x8x1xf32>
    %51 = vector.broadcast %50 : vector<1x8x1xf32> to vector<1x8x8xf32>
    %52 = arith.subf %48, %51 : vector<1x8x8xf32>
    %53 = math.exp %52 : vector<1x8x8xf32>
    %cst_22 = arith.constant dense<0.000000e+00> : vector<1x8xf32>
    %54 = vector.multi_reduction <add>, %53, %cst_22 [2] : vector<1x8x8xf32> to vector<1x8xf32>
    %55 = vector.shape_cast %54 : vector<1x8xf32> to vector<1x8x1xf32>
    %56 = arith.truncf %53 : vector<1x8x8xf32> to vector<1x8x8xbf16>
    "tpu.trace_start"() <{level = 10 : i32, message = "bij,bjk->bik"}> : () -> ()
    %cst_23 = arith.constant dense<0.000000e+00> : vector<1x8x16xf32>
    %57 = tpu.matmul %56, %45, %cst_23 {dimension_numbers = #tpu.dot_dimension_numbers<[2], [1], [1], [2], [0, 0, 0, 1, 1, 2], [0], [0]>} : vector<1x8x8xbf16>, vector<1x8x16xbf16>, vector<1x8x16xf32> -> vector<1x8x16xf32>
    "tpu.trace_stop"() : () -> ()
    %58 = tpu.reciprocal %55 {approx = true} : vector<1x8x1xf32> -> vector<1x8x1xf32>
    %59 = vector.broadcast %58 : vector<1x8x1xf32> to vector<1x8x16xf32>
    %60 = arith.mulf %57, %59 : vector<1x8x16xf32>
    %c0_24 = arith.constant 0 : index
    %c0_25 = arith.constant 0 : index
    %61 = vector.load %arg9[%c0_24, %c0_25] : memref<8x128xf32, #tpu.memory_space<vmem>>, vector<8x128xf32>
    %62 = arith.truncf %60 : vector<1x8x16xf32> to vector<1x8x16xbf16>
    %63 = vector.shape_cast %62 : vector<1x8x16xbf16> to vector<8x16xbf16>
    %c0_26 = arith.constant 0 : index
    %c0_27 = arith.constant 0 : index
    %c0_28 = arith.constant 0 : index
    %64 = vector.load %arg6[%c0_26, %c0_27, %c0_28] : memref<4x16x128xbf16, #tpu.memory_space<vmem>>, vector<1x16x128xbf16>
    %65 = vector.shape_cast %64 : vector<1x16x128xbf16> to vector<16x128xbf16>
    %cst_29 = arith.constant dense<0.000000e+00> : vector<8x128xf32>
    %66 = tpu.matmul %63, %65, %cst_29 {dimension_numbers = #tpu.dot_dimension_numbers<[1], [0], [0], [1], [0, 0, 1, 1], [], []>} : vector<8x16xbf16>, vector<16x128xbf16>, vector<8x128xf32> -> vector<8x128xf32>
    %67 = arith.addf %61, %66 : vector<8x128xf32>
    %c0_30 = arith.constant 0 : index
    %c0_31 = arith.constant 0 : index
    %68 = vector.load %arg9[%c0_30, %c0_31] : memref<8x128xf32, #tpu.memory_space<vmem>>, vector<8x128xf32>
    tpu.vector_store %arg9[%c0_30, %c0_31], %67 {strides = array<i32>} : memref<8x128xf32, #tpu.memory_space<vmem>>, vector<8x128xf32>,
    %c1 = arith.constant 1 : index
    %c0_32 = arith.constant 0 : index
    %c0_33 = arith.constant 0 : index
    %69 = vector.load %arg5[%c1, %c0_32, %c0_33] : memref<4x128x48xbf16, #tpu.memory_space<vmem>>, vector<1x128x48xbf16>
    %70 = vector.shape_cast %69 : vector<1x128x48xbf16> to vector<128x48xbf16>
    %cst_34 = arith.constant dense<0.000000e+00> : vector<8x48xf32>
    %71 = tpu.matmul %30, %70, %cst_34 {dimension_numbers = #tpu.dot_dimension_numbers<[1], [0], [0], [1], [0, 0, 1, 1], [], []>} : vector<8x128xbf16>, vector<128x48xbf16>, vector<8x48xf32> -> vector<8x48xf32>
    %72 = vector.extract_strided_slice %71 {offsets = [0, 0], sizes = [8, 16], strides = [1, 1]} : vector<8x48xf32> to vector<8x16xf32>
    %73 = arith.truncf %72 : vector<8x16xf32> to vector<8x16xbf16>
    %74 = vector.shape_cast %73 : vector<8x16xbf16> to vector<1x8x16xbf16>
    %75 = vector.extract_strided_slice %71 {offsets = [0, 16], sizes = [8, 16], strides = [1, 1]} : vector<8x48xf32> to vector<8x16xf32>
    %76 = arith.truncf %75 : vector<8x16xf32> to vector<8x16xbf16>
    %77 = vector.shape_cast %76 : vector<8x16xbf16> to vector<1x8x16xbf16>
    %78 = vector.extract_strided_slice %71 {offsets = [0, 32], sizes = [8, 16], strides = [1, 1]} : vector<8x48xf32> to vector<8x16xf32>
    %79 = arith.truncf %78 : vector<8x16xf32> to vector<8x16xbf16>
    %80 = vector.shape_cast %79 : vector<8x16xbf16> to vector<1x8x16xbf16>
    "tpu.trace_start"() <{level = 10 : i32, message = "bik,bjk->bij"}> : () -> ()
    %cst_35 = arith.constant dense<0.000000e+00> : vector<1x8x8xf32>
    %81 = tpu.matmul %74, %77, %cst_35 {dimension_numbers = #tpu.dot_dimension_numbers<[2], [2], [1], [1], [0, 0, 0, 1, 1, 1], [0], [0]>} : vector<1x8x16xbf16>, vector<1x8x16xbf16>, vector<1x8x8xf32> -> vector<1x8x8xf32>
    "tpu.trace_stop"() : () -> ()
    %82 = vector.broadcast %31 : vector<1x1x8xf32> to vector<1x8x8xf32>
    %83 = arith.addf %81, %82 : vector<1x8x8xf32>
    %cst_36 = arith.constant dense<0xFF800000> : vector<1x8xf32>
    %84 = vector.multi_reduction <maximumf>, %83, %cst_36 [2] : vector<1x8x8xf32> to vector<1x8xf32>
    %85 = vector.shape_cast %84 : vector<1x8xf32> to vector<1x8x1xf32>
    %86 = vector.broadcast %85 : vector<1x8x1xf32> to vector<1x8x8xf32>
    %87 = arith.subf %83, %86 : vector<1x8x8xf32>
    %88 = math.exp %87 : vector<1x8x8xf32>
    %cst_37 = arith.constant dense<0.000000e+00> : vector<1x8xf32>
    %89 = vector.multi_reduction <add>, %88, %cst_37 [2] : vector<1x8x8xf32> to vector<1x8xf32>
    %90 = vector.shape_cast %89 : vector<1x8xf32> to vector<1x8x1xf32>
    %91 = arith.truncf %88 : vector<1x8x8xf32> to vector<1x8x8xbf16>
    "tpu.trace_start"() <{level = 10 : i32, message = "bij,bjk->bik"}> : () -> ()
    %cst_38 = arith.constant dense<0.000000e+00> : vector<1x8x16xf32>
    %92 = tpu.matmul %91, %80, %cst_38 {dimension_numbers = #tpu.dot_dimension_numbers<[2], [1], [1], [2], [0, 0, 0, 1, 1, 2], [0], [0]>} : vector<1x8x8xbf16>, vector<1x8x16xbf16>, vector<1x8x16xf32> -> vector<1x8x16xf32>
    "tpu.trace_stop"() : () -> ()
    %93 = tpu.reciprocal %90 {approx = true} : vector<1x8x1xf32> -> vector<1x8x1xf32>
    %94 = vector.broadcast %93 : vector<1x8x1xf32> to vector<1x8x16xf32>
    %95 = arith.mulf %92, %94 : vector<1x8x16xf32>
    %c0_39 = arith.constant 0 : index
    %c0_40 = arith.constant 0 : index
    %96 = vector.load %arg9[%c0_39, %c0_40] : memref<8x128xf32, #tpu.memory_space<vmem>>, vector<8x128xf32>
    %97 = arith.truncf %95 : vector<1x8x16xf32> to vector<1x8x16xbf16>
    %98 = vector.shape_cast %97 : vector<1x8x16xbf16> to vector<8x16xbf16>
    %c1_41 = arith.constant 1 : index
    %c0_42 = arith.constant 0 : index
    %c0_43 = arith.constant 0 : index
    %99 = vector.load %arg6[%c1_41, %c0_42, %c0_43] : memref<4x16x128xbf16, #tpu.memory_space<vmem>>, vector<1x16x128xbf16>
    %100 = vector.shape_cast %99 : vector<1x16x128xbf16> to vector<16x128xbf16>
    %cst_44 = arith.constant dense<0.000000e+00> : vector<8x128xf32>
    %101 = tpu.matmul %98, %100, %cst_44 {dimension_numbers = #tpu.dot_dimension_numbers<[1], [0], [0], [1], [0, 0, 1, 1], [], []>} : vector<8x16xbf16>, vector<16x128xbf16>, vector<8x128xf32> -> vector<8x128xf32>
    %102 = arith.addf %96, %101 : vector<8x128xf32>
    %c0_45 = arith.constant 0 : index
    %c0_46 = arith.constant 0 : index
    %103 = vector.load %arg9[%c0_45, %c0_46] : memref<8x128xf32, #tpu.memory_space<vmem>>, vector<8x128xf32>
    tpu.vector_store %arg9[%c0_45, %c0_46], %102 {strides = array<i32>} : memref<8x128xf32, #tpu.memory_space<vmem>>, vector<8x128xf32>,
    %c2 = arith.constant 2 : index
    %c0_47 = arith.constant 0 : index
    %c0_48 = arith.constant 0 : index
    %104 = vector.load %arg5[%c2, %c0_47, %c0_48] : memref<4x128x48xbf16, #tpu.memory_space<vmem>>, vector<1x128x48xbf16>
    %105 = vector.shape_cast %104 : vector<1x128x48xbf16> to vector<128x48xbf16>
    %cst_49 = arith.constant dense<0.000000e+00> : vector<8x48xf32>
    %106 = tpu.matmul %30, %105, %cst_49 {dimension_numbers = #tpu.dot_dimension_numbers<[1], [0], [0], [1], [0, 0, 1, 1], [], []>} : vector<8x128xbf16>, vector<128x48xbf16>, vector<8x48xf32> -> vector<8x48xf32>
    %107 = vector.extract_strided_slice %106 {offsets = [0, 0], sizes = [8, 16], strides = [1, 1]} : vector<8x48xf32> to vector<8x16xf32>
    %108 = arith.truncf %107 : vector<8x16xf32> to vector<8x16xbf16>
    %109 = vector.shape_cast %108 : vector<8x16xbf16> to vector<1x8x16xbf16>
    %110 = vector.extract_strided_slice %106 {offsets = [0, 16], sizes = [8, 16], strides = [1, 1]} : vector<8x48xf32> to vector<8x16xf32>
    %111 = arith.truncf %110 : vector<8x16xf32> to vector<8x16xbf16>
    %112 = vector.shape_cast %111 : vector<8x16xbf16> to vector<1x8x16xbf16>
    %113 = vector.extract_strided_slice %106 {offsets = [0, 32], sizes = [8, 16], strides = [1, 1]} : vector<8x48xf32> to vector<8x16xf32>
    %114 = arith.truncf %113 : vector<8x16xf32> to vector<8x16xbf16>
    %115 = vector.shape_cast %114 : vector<8x16xbf16> to vector<1x8x16xbf16>
    "tpu.trace_start"() <{level = 10 : i32, message = "bik,bjk->bij"}> : () -> ()
    %cst_50 = arith.constant dense<0.000000e+00> : vector<1x8x8xf32>
    %116 = tpu.matmul %109, %112, %cst_50 {dimension_numbers = #tpu.dot_dimension_numbers<[2], [2], [1], [1], [0, 0, 0, 1, 1, 1], [0], [0]>} : vector<1x8x16xbf16>, vector<1x8x16xbf16>, vector<1x8x8xf32> -> vector<1x8x8xf32>
    "tpu.trace_stop"() : () -> ()
    %117 = vector.broadcast %31 : vector<1x1x8xf32> to vector<1x8x8xf32>
    %118 = arith.addf %116, %117 : vector<1x8x8xf32>
    %cst_51 = arith.constant dense<0xFF800000> : vector<1x8xf32>
    %119 = vector.multi_reduction <maximumf>, %118, %cst_51 [2] : vector<1x8x8xf32> to vector<1x8xf32>
    %120 = vector.shape_cast %119 : vector<1x8xf32> to vector<1x8x1xf32>
    %121 = vector.broadcast %120 : vector<1x8x1xf32> to vector<1x8x8xf32>
    %122 = arith.subf %118, %121 : vector<1x8x8xf32>
    %123 = math.exp %122 : vector<1x8x8xf32>
    %cst_52 = arith.constant dense<0.000000e+00> : vector<1x8xf32>
    %124 = vector.multi_reduction <add>, %123, %cst_52 [2] : vector<1x8x8xf32> to vector<1x8xf32>
    %125 = vector.shape_cast %124 : vector<1x8xf32> to vector<1x8x1xf32>
    %126 = arith.truncf %123 : vector<1x8x8xf32> to vector<1x8x8xbf16>
    "tpu.trace_start"() <{level = 10 : i32, message = "bij,bjk->bik"}> : () -> ()
    %cst_53 = arith.constant dense<0.000000e+00> : vector<1x8x16xf32>
    %127 = tpu.matmul %126, %115, %cst_53 {dimension_numbers = #tpu.dot_dimension_numbers<[2], [1], [1], [2], [0, 0, 0, 1, 1, 2], [0], [0]>} : vector<1x8x8xbf16>, vector<1x8x16xbf16>, vector<1x8x16xf32> -> vector<1x8x16xf32>
    "tpu.trace_stop"() : () -> ()
    %128 = tpu.reciprocal %125 {approx = true} : vector<1x8x1xf32> -> vector<1x8x1xf32>
    %129 = vector.broadcast %128 : vector<1x8x1xf32> to vector<1x8x16xf32>
    %130 = arith.mulf %127, %129 : vector<1x8x16xf32>
    %c0_54 = arith.constant 0 : index
    %c0_55 = arith.constant 0 : index
    %131 = vector.load %arg9[%c0_54, %c0_55] : memref<8x128xf32, #tpu.memory_space<vmem>>, vector<8x128xf32>
    %132 = arith.truncf %130 : vector<1x8x16xf32> to vector<1x8x16xbf16>
    %133 = vector.shape_cast %132 : vector<1x8x16xbf16> to vector<8x16xbf16>
    %c2_56 = arith.constant 2 : index
    %c0_57 = arith.constant 0 : index
    %c0_58 = arith.constant 0 : index
    %134 = vector.load %arg6[%c2_56, %c0_57, %c0_58] : memref<4x16x128xbf16, #tpu.memory_space<vmem>>, vector<1x16x128xbf16>
    %135 = vector.shape_cast %134 : vector<1x16x128xbf16> to vector<16x128xbf16>
    %cst_59 = arith.constant dense<0.000000e+00> : vector<8x128xf32>
    %136 = tpu.matmul %133, %135, %cst_59 {dimension_numbers = #tpu.dot_dimension_numbers<[1], [0], [0], [1], [0, 0, 1, 1], [], []>} : vector<8x16xbf16>, vector<16x128xbf16>, vector<8x128xf32> -> vector<8x128xf32>
    %137 = arith.addf %131, %136 : vector<8x128xf32>
    %c0_60 = arith.constant 0 : index
    %c0_61 = arith.constant 0 : index
    %138 = vector.load %arg9[%c0_60, %c0_61] : memref<8x128xf32, #tpu.memory_space<vmem>>, vector<8x128xf32>
    tpu.vector_store %arg9[%c0_60, %c0_61], %137 {strides = array<i32>} : memref<8x128xf32, #tpu.memory_space<vmem>>, vector<8x128xf32>,
    %c3 = arith.constant 3 : index
    %c0_62 = arith.constant 0 : index
    %c0_63 = arith.constant 0 : index
    %139 = vector.load %arg5[%c3, %c0_62, %c0_63] : memref<4x128x48xbf16, #tpu.memory_space<vmem>>, vector<1x128x48xbf16>
    %140 = vector.shape_cast %139 : vector<1x128x48xbf16> to vector<128x48xbf16>
    %cst_64 = arith.constant dense<0.000000e+00> : vector<8x48xf32>
    %141 = tpu.matmul %30, %140, %cst_64 {dimension_numbers = #tpu.dot_dimension_numbers<[1], [0], [0], [1], [0, 0, 1, 1], [], []>} : vector<8x128xbf16>, vector<128x48xbf16>, vector<8x48xf32> -> vector<8x48xf32>
    %142 = vector.extract_strided_slice %141 {offsets = [0, 0], sizes = [8, 16], strides = [1, 1]} : vector<8x48xf32> to vector<8x16xf32>
    %143 = arith.truncf %142 : vector<8x16xf32> to vector<8x16xbf16>
    %144 = vector.shape_cast %143 : vector<8x16xbf16> to vector<1x8x16xbf16>
    %145 = vector.extract_strided_slice %141 {offsets = [0, 16], sizes = [8, 16], strides = [1, 1]} : vector<8x48xf32> to vector<8x16xf32>
    %146 = arith.truncf %145 : vector<8x16xf32> to vector<8x16xbf16>
    %147 = vector.shape_cast %146 : vector<8x16xbf16> to vector<1x8x16xbf16>
    %148 = vector.extract_strided_slice %141 {offsets = [0, 32], sizes = [8, 16], strides = [1, 1]} : vector<8x48xf32> to vector<8x16xf32>
    %149 = arith.truncf %148 : vector<8x16xf32> to vector<8x16xbf16>
    %150 = vector.shape_cast %149 : vector<8x16xbf16> to vector<1x8x16xbf16>
    "tpu.trace_start"() <{level = 10 : i32, message = "bik,bjk->bij"}> : () -> ()
    %cst_65 = arith.constant dense<0.000000e+00> : vector<1x8x8xf32>
    %151 = tpu.matmul %144, %147, %cst_65 {dimension_numbers = #tpu.dot_dimension_numbers<[2], [2], [1], [1], [0, 0, 0, 1, 1, 1], [0], [0]>} : vector<1x8x16xbf16>, vector<1x8x16xbf16>, vector<1x8x8xf32> -> vector<1x8x8xf32>
    "tpu.trace_stop"() : () -> ()
    %152 = vector.broadcast %31 : vector<1x1x8xf32> to vector<1x8x8xf32>
    %153 = arith.addf %151, %152 : vector<1x8x8xf32>
    %cst_66 = arith.constant dense<0xFF800000> : vector<1x8xf32>
    %154 = vector.multi_reduction <maximumf>, %153, %cst_66 [2] : vector<1x8x8xf32> to vector<1x8xf32>
    %155 = vector.shape_cast %154 : vector<1x8xf32> to vector<1x8x1xf32>
    %156 = vector.broadcast %155 : vector<1x8x1xf32> to vector<1x8x8xf32>
    %157 = arith.subf %153, %156 : vector<1x8x8xf32>
    %158 = math.exp %157 : vector<1x8x8xf32>
    %cst_67 = arith.constant dense<0.000000e+00> : vector<1x8xf32>
    %159 = vector.multi_reduction <add>, %158, %cst_67 [2] : vector<1x8x8xf32> to vector<1x8xf32>
    %160 = vector.shape_cast %159 : vector<1x8xf32> to vector<1x8x1xf32>
    %161 = arith.truncf %158 : vector<1x8x8xf32> to vector<1x8x8xbf16>
    "tpu.trace_start"() <{level = 10 : i32, message = "bij,bjk->bik"}> : () -> ()
    %cst_68 = arith.constant dense<0.000000e+00> : vector<1x8x16xf32>
    %162 = tpu.matmul %161, %150, %cst_68 {dimension_numbers = #tpu.dot_dimension_numbers<[2], [1], [1], [2], [0, 0, 0, 1, 1, 2], [0], [0]>} : vector<1x8x8xbf16>, vector<1x8x16xbf16>, vector<1x8x16xf32> -> vector<1x8x16xf32>
    "tpu.trace_stop"() : () -> ()
    %163 = tpu.reciprocal %160 {approx = true} : vector<1x8x1xf32> -> vector<1x8x1xf32>
    %164 = vector.broadcast %163 : vector<1x8x1xf32> to vector<1x8x16xf32>
    %165 = arith.mulf %162, %164 : vector<1x8x16xf32>
    %c0_69 = arith.constant 0 : index
    %c0_70 = arith.constant 0 : index
    %166 = vector.load %arg9[%c0_69, %c0_70] : memref<8x128xf32, #tpu.memory_space<vmem>>, vector<8x128xf32>
    %167 = arith.truncf %165 : vector<1x8x16xf32> to vector<1x8x16xbf16>
    %168 = vector.shape_cast %167 : vector<1x8x16xbf16> to vector<8x16xbf16>
    %c3_71 = arith.constant 3 : index
    %c0_72 = arith.constant 0 : index
    %c0_73 = arith.constant 0 : index
    %169 = vector.load %arg6[%c3_71, %c0_72, %c0_73] : memref<4x16x128xbf16, #tpu.memory_space<vmem>>, vector<1x16x128xbf16>
    %170 = vector.shape_cast %169 : vector<1x16x128xbf16> to vector<16x128xbf16>
    %cst_74 = arith.constant dense<0.000000e+00> : vector<8x128xf32>
    %171 = tpu.matmul %168, %170, %cst_74 {dimension_numbers = #tpu.dot_dimension_numbers<[1], [0], [0], [1], [0, 0, 1, 1], [], []>} : vector<8x16xbf16>, vector<16x128xbf16>, vector<8x128xf32> -> vector<8x128xf32>
    %172 = arith.addf %166, %171 : vector<8x128xf32>
    %c0_75 = arith.constant 0 : index
    %c0_76 = arith.constant 0 : index
    %173 = vector.load %arg9[%c0_75, %c0_76] : memref<8x128xf32, #tpu.memory_space<vmem>>, vector<8x128xf32>
    tpu.vector_store %arg9[%c0_75, %c0_76], %172 {strides = array<i32>} : memref<8x128xf32, #tpu.memory_space<vmem>>, vector<8x128xf32>,
    %c0_77 = arith.constant 0 : index
    %c0_78 = arith.constant 0 : index
    %174 = vector.load %arg9[%c0_77, %c0_78] : memref<8x128xf32, #tpu.memory_space<vmem>>, vector<8x128xf32>
    %c0_79 = arith.constant 0 : index
    %c0_80 = arith.constant 0 : index
    %175 = vector.load %arg7[%c0_79, %c0_80] : memref<1x128xf32, #tpu.memory_space<vmem>>, vector<1x128xf32>
    %176 = vector.shape_cast %175 : vector<1x128xf32> to vector<128xf32>
    %177 = vector.shape_cast %176 : vector<128xf32> to vector<1x128xf32>
    %178 = vector.broadcast %177 : vector<1x128xf32> to vector<8x128xf32>
    %179 = arith.addf %174, %178 : vector<8x128xf32>
    %180 = vector.shape_cast %179 : vector<8x128xf32> to vector<1x8x128xf32>
    %c0_81 = arith.constant 0 : index
    %c0_82 = arith.constant 0 : index
    %c0_83 = arith.constant 0 : index
    %181 = vector.load %arg8[%c0_81, %c0_82, %c0_83] : memref<1x8x128xf32, #tpu.memory_space<vmem>>, vector<1x8x128xf32>
    tpu.vector_store %arg8[%c0_81, %c0_82, %c0_83], %180 {strides = array<i32>} : memref<1x8x128xf32, #tpu.memory_space<vmem>>, vector<1x8x128xf32>,
    return
  }
  func.func @transform_0(%arg0: i32) -> (i32, i32, i32) {
    %c0_i32 = arith.constant 0 : i32
    %c0_i32_0 = arith.constant 0 : i32
    %c0_i32_1 = arith.constant 0 : i32
    return %arg0, %c0_i32, %c0_i32_0 : i32, i32, i32
  }
  func.func @transform_1(%arg0: i32) -> (i32, i32, i32) {
    %c0_i32 = arith.constant 0 : i32
    %c0_i32_0 = arith.constant 0 : i32
    %c0_i32_1 = arith.constant 0 : i32
    return %arg0, %c0_i32, %c0_i32_0 : i32, i32, i32
  }
  func.func @transform_2(%arg0: i32) -> (i32, i32) {
    %c0_i32 = arith.constant 0 : i32
    %c0_i32_0 = arith.constant 0 : i32
    %c0_i32_1 = arith.constant 0 : i32
    return %c0_i32, %c0_i32_0 : i32, i32
  }
  func.func @transform_3(%arg0: i32) -> (i32, i32) {
    %c0_i32 = arith.constant 0 : i32
    %c0_i32_0 = arith.constant 0 : i32
    %c0_i32_1 = arith.constant 0 : i32
    return %c0_i32, %c0_i32_0 : i32, i32
  }
  func.func @transform_4(%arg0: i32) -> (i32, i32, i32) {
    %c0_i32 = arith.constant 0 : i32
    %c0_i32_0 = arith.constant 0 : i32
    %c0_i32_1 = arith.constant 0 : i32
    %c0_i32_2 = arith.constant 0 : i32
    return %c0_i32, %c0_i32_0, %c0_i32_1 : i32, i32, i32
  }
  func.func @transform_5(%arg0: i32) -> (i32, i32, i32) {
    %c0_i32 = arith.constant 0 : i32
    %c0_i32_0 = arith.constant 0 : i32
    %c0_i32_1 = arith.constant 0 : i32
    %c0_i32_2 = arith.constant 0 : i32
    return %c0_i32, %c0_i32_0, %c0_i32_1 : i32, i32, i32
  }
  func.func @transform_6(%arg0: i32) -> (i32, i32) {
    %c0_i32 = arith.constant 0 : i32
    %c0_i32_0 = arith.constant 0 : i32
    %c0_i32_1 = arith.constant 0 : i32
    return %c0_i32, %c0_i32_0 : i32, i32
  }
  func.func @transform_7(%arg0: i32) -> (i32, i32, i32) {
    %c0_i32 = arith.constant 0 : i32
    %c0_i32_0 = arith.constant 0 : i32
    %c0_i32_1 = arith.constant 0 : i32
    return %arg0, %c0_i32, %c0_i32_0 : i32, i32, i32
  }
}

</mosaic_0001>

<llo_original>
// kernel: tpu_custom_call.1
$region0: #{tpu_custom_call.1}
  #allocation0 [shape = 'u32[]', space=smem, size = 0x4, offset = 0x4, fixed_abs, tag = 'smem constant byte address 0x4 - core index']
  #allocation1 [shape = 'u32[72,128]{1,0:T(1,128)}', space=vmem, size = 0x9000, scoped, tag = 'internal scratch']
  #allocation2 [shape = 'f32[8,128]{1,0:T(8,128)}', space=vmem, size = 0x1000, scoped, tag = 'scratch operand']
  %s0 = inlined_call_operand.vmem [shape: f32[2,8,128], index: 0, kind: input, shape index: {}]
  %s1 = inlined_call_operand.vmem [shape: f32[2,1,8], index: 1, kind: input, shape index: {}]
  %s2 = inlined_call_operand.vmem [shape: f32[1,128], index: 2, kind: input, shape index: {}]
  %s3 = inlined_call_operand.vmem [shape: f32[1,128], index: 3, kind: input, shape index: {}]
  %s4 = inlined_call_operand.vmem [shape: bf16[4,128,48], index: 4, kind: input, shape index: {}]
  %s5 = inlined_call_operand.vmem [shape: bf16[4,16,128], index: 5, kind: input, shape index: {}]
  %s6 = inlined_call_operand.vmem [shape: f32[1,128], index: 6, kind: input, shape index: {}]
  %s7 = inlined_call_operand.hbm [shape: f32[2,8,128], index: 7, kind: output, shape index: {}]
  %s8 = sld [smem:[#allocation0]]
  $region61: #{tpu_custom_call.1} parent=0
    _
  %s10 = ssub.s32 1, %s8
  %s11 = scalar_select 0, %s10, %s8
  $region1: #{tpu_custom_call.1} parent=0
    #allocation3 [shape = 'u8[8192]{0}', space=vmem, size = 0x2000, scoped, tag = 'output window, operand 0']
    #allocation4 [shape = 's32[2]{0}', space=sflag, size = 0x8, scoped, tag = 'scoped memory for tpu_custom_call.1']
    %12 = vsyncpa [#allocation4], 0
    %s13 = scalar_lea.sflag [#allocation4], 1
    %14 = vsyncpa %s13, 0
    loop: start=0, step=1, limit=4
    $region2: #{tpu_custom_call.1} parent=1 // loop_pre_header
      _
    $region3: #{tpu_custom_call.1} parent=1 // loop_header
      %s16 = sphi 0, %s20
      %p17 = scmp.ge.s32.totalorder %s16, 4
      %s26 = sphi 0, %s28
      %s29 = sphi 0, %s26
      %s30 = sphi 0, %s29
      %s46 = sphi 0, %s30
      %s52 = sphi 0, %s54
      %s55 = sphi 0, %s52
      %s56 = sphi 0, %s55
      %s72 = sphi 0, %s56
      %s76 = sphi 0, %s76
      %s78 = sphi 0, %s76
      %s79 = sphi 0, %s78
      %s93 = sphi 0, %s79
      %s97 = sphi 0, %s97
      %s99 = sphi 0, %s97
      %s100 = sphi 0, %s99
      %s114 = sphi 0, %s100
      %s118 = sphi 0, %s118
      %s120 = sphi 0, %s118
      %s121 = sphi 0, %s120
      %s135 = sphi 0, %s121
      %s139 = sphi 0, %s139
      %s141 = sphi 0, %s139
      %s142 = sphi 0, %s141
      %s156 = sphi 0, %s142
      %s160 = sphi 0, %s160
      %s162 = sphi 0, %s160
      %s163 = sphi 0, %s162
      %s177 = sphi 0, %s163
      %s183 = sphi 0, %s185
      %s186 = sphi 0, %s183
      %s187 = sphi 0, %s186
      %s203 = sphi 0, %s187
    $region4: #{tpu_custom_call.1} parent=1 // loop_header_branch
      %19 = sbr.rel (%p17) target = $region8
    $region5: #{tpu_custom_call.1} parent=1 // loop_body
      %s21 = ssub.s32 %s16, 1
      %s22 = ssub.s32 %s16, 2
      %s23 = sadd.s32 %s16, 1
      %s24 = ssub.s32 %s16, %s23
      %p25 = scmp.eq.s32.totalorder %s24, 0
      %s27 = sadd.s32 %s26, 1
      %s28 = scalar_select %p25, %s26, %s27
      %p31 = pneg %p25
      %p32 = scmp.eq.s32.totalorder %s16, 1
      %p33 = por %p31, %p32
      %p34 = scmp.ne.s32.totalorder %s26, %s29
      %p35 = scmp.eq.s32.totalorder %s16, 0
      %p36 = por %p34, %p35
      %p37 = scmp.ne.s32.totalorder %s26, %s29
      %p38 = scmp.eq.s32.totalorder %s21, 1
      %p39 = por %p37, %p38
      %p40 = scmp.ne.s32.totalorder %s29, %s30
      %p41 = scmp.eq.s32.totalorder %s21, 0
      %p42 = por %p40, %p41
      %p43 = scmp.ne.s32.totalorder %s29, %s30
      %p44 = scmp.eq.s32.totalorder %s22, 1
      %p45 = por %p43, %p44
      %p47 = scmp.ne.s32.totalorder %s30, %s46
      %p48 = scmp.eq.s32.totalorder %s22, 0
      %p49 = por %p47, %p48
      %s50 = ssub.s32 %s16, %s23
      %p51 = scmp.eq.s32.totalorder %s50, 0
      %s53 = sadd.s32 %s52, 1
      %s54 = scalar_select %p51, %s52, %s53
      %p57 = pneg %p51
      %p58 = scmp.eq.s32.totalorder %s16, 1
      %p59 = por %p57, %p58
      %p60 = scmp.ne.s32.totalorder %s52, %s55
      %p61 = scmp.eq.s32.totalorder %s16, 0
      %p62 = por %p60, %p61
      %p63 = scmp.ne.s32.totalorder %s52, %s55
      %p64 = scmp.eq.s32.totalorder %s21, 1
      %p65 = por %p63, %p64
      %p66 = scmp.ne.s32.totalorder %s55, %s56
      %p67 = scmp.eq.s32.totalorder %s21, 0
      %p68 = por %p66, %p67
      %p69 = scmp.ne.s32.totalorder %s55, %s56
      %p70 = scmp.eq.s32.totalorder %s22, 1
      %p71 = por %p69, %p70
      %p73 = scmp.ne.s32.totalorder %s56, %s72
      %p74 = scmp.eq.s32.totalorder %s22, 0
      %p75 = por %p73, %p74
      %s77 = sadd.s32 %s76, 1
      %p80 = scmp.eq.s32.totalorder %s16, 1
      %p81 = scmp.ne.s32.totalorder %s76, %s78
      %p82 = scmp.eq.s32.totalorder %s16, 0
      %p83 = por %p81, %p82
      %p84 = scmp.ne.s32.totalorder %s76, %s78
      %p85 = scmp.eq.s32.totalorder %s21, 1
      %p86 = por %p84, %p85
      %p87 = scmp.ne.s32.totalorder %s78, %s79
      %p88 = scmp.eq.s32.totalorder %s21, 0
      %p89 = por %p87, %p88
      %p90 = scmp.ne.s32.totalorder %s78, %s79
      %p91 = scmp.eq.s32.totalorder %s22, 1
      %p92 = por %p90, %p91
      %p94 = scmp.ne.s32.totalorder %s79, %s93
      %p95 = scmp.eq.s32.totalorder %s22, 0
      %p96 = por %p94, %p95
      %s98 = sadd.s32 %s97, 1
      %p101 = scmp.eq.s32.totalorder %s16, 1
      %p102 = scmp.ne.s32.totalorder %s97, %s99
      %p103 = scmp.eq.s32.totalorder %s16, 0
      %p104 = por %p102, %p103
      %p105 = scmp.ne.s32.totalorder %s97, %s99
      %p106 = scmp.eq.s32.totalorder %s21, 1
      %p107 = por %p105, %p106
      %p108 = scmp.ne.s32.totalorder %s99, %s100
      %p109 = scmp.eq.s32.totalorder %s21, 0
      %p110 = por %p108, %p109
      %p111 = scmp.ne.s32.totalorder %s99, %s100
      %p112 = scmp.eq.s32.totalorder %s22, 1
      %p113 = por %p111, %p112
      %p115 = scmp.ne.s32.totalorder %s100, %s114
      %p116 = scmp.eq.s32.totalorder %s22, 0
      %p117 = por %p115, %p116
      %s119 = sadd.s32 %s118, 1
      %p122 = scmp.eq.s32.totalorder %s16, 1
      %p123 = scmp.ne.s32.totalorder %s118, %s120
      %p124 = scmp.eq.s32.totalorder %s16, 0
      %p125 = por %p123, %p124
      %p126 = scmp.ne.s32.totalorder %s118, %s120
      %p127 = scmp.eq.s32.totalorder %s21, 1
      %p128 = por %p126, %p127
      %p129 = scmp.ne.s32.totalorder %s120, %s121
      %p130 = scmp.eq.s32.totalorder %s21, 0
      %p131 = por %p129, %p130
      %p132 = scmp.ne.s32.totalorder %s120, %s121
      %p133 = scmp.eq.s32.totalorder %s22, 1
      %p134 = por %p132, %p133
      %p136 = scmp.ne.s32.totalorder %s121, %s135
      %p137 = scmp.eq.s32.totalorder %s22, 0
      %p138 = por %p136, %p137
      %s140 = sadd.s32 %s139, 1
      %p143 = scmp.eq.s32.totalorder %s16, 1
      %p144 = scmp.ne.s32.totalorder %s139, %s141
      %p145 = scmp.eq.s32.totalorder %s16, 0
      %p146 = por %p144, %p145
      %p147 = scmp.ne.s32.totalorder %s139, %s141
      %p148 = scmp.eq.s32.totalorder %s21, 1
      %p149 = por %p147, %p148
      %p150 = scmp.ne.s32.totalorder %s141, %s142
      %p151 = scmp.eq.s32.totalorder %s21, 0
      %p152 = por %p150, %p151
      %p153 = scmp.ne.s32.totalorder %s141, %s142
      %p154 = scmp.eq.s32.totalorder %s22, 1
      %p155 = por %p153, %p154
      %p157 = scmp.ne.s32.totalorder %s142, %s156
      %p158 = scmp.eq.s32.totalorder %s22, 0
      %p159 = por %p157, %p158
      %s161 = sadd.s32 %s160, 1
      %p164 = scmp.eq.s32.totalorder %s16, 1
      %p165 = scmp.ne.s32.totalorder %s160, %s162
      %p166 = scmp.eq.s32.totalorder %s16, 0
      %p167 = por %p165, %p166
      %p168 = scmp.ne.s32.totalorder %s160, %s162
      %p169 = scmp.eq.s32.totalorder %s21, 1
      %p170 = por %p168, %p169
      %p171 = scmp.ne.s32.totalorder %s162, %s163
      %p172 = scmp.eq.s32.totalorder %s21, 0
      %p173 = por %p171, %p172
      %p174 = scmp.ne.s32.totalorder %s162, %s163
      %p175 = scmp.eq.s32.totalorder %s22, 1
      %p176 = por %p174, %p175
      %p178 = scmp.ne.s32.totalorder %s163, %s177
      %p179 = scmp.eq.s32.totalorder %s22, 0
      %p180 = por %p178, %p179
      %s181 = ssub.s32 %s16, %s23
      %p182 = scmp.eq.s32.totalorder %s181, 0
      %s184 = sadd.s32 %s183, 1
      %s185 = scalar_select %p182, %s183, %s184
      %p188 = pneg %p182
      %p189 = scmp.eq.s32.totalorder %s16, 1
      %p190 = por %p188, %p189
      %p191 = scmp.ne.s32.totalorder %s183, %s186
      %p192 = scmp.eq.s32.totalorder %s16, 0
      %p193 = por %p191, %p192
      %p194 = scmp.ne.s32.totalorder %s183, %s186
      %p195 = scmp.eq.s32.totalorder %s21, 1
      %p196 = por %p194, %p195
      %p197 = scmp.ne.s32.totalorder %s186, %s187
      %p198 = scmp.eq.s32.totalorder %s21, 0
      %p199 = por %p197, %p198
      %p200 = scmp.ne.s32.totalorder %s186, %s187
      %p201 = scmp.eq.s32.totalorder %s22, 1
      %p202 = por %p200, %p201
      %p204 = scmp.ne.s32.totalorder %s187, %s203
      %p205 = scmp.eq.s32.totalorder %s22, 0
      %p206 = por %p204, %p205
      %p207 = scmp.le.s32.totalorder 1, %s16
      %p208 = scmp.lt.s32.totalorder %s16, 3
      %p209 = pnand %p207, %p208
      %p210 = pneg %p209
      // Predicated region
      $region9: #{tpu_custom_call.1} parent=5 // pred_check
        _
      $region10: #{tpu_custom_call.1} parent=5 // pred_check_branch
        %212 = sbr.rel (%p209) target = $region12
      $region11: #{tpu_custom_call.1} parent=5 // pred_region
        %s213 = ssub.s32 %s16, 1
        // Predicated region
        $region13: #{tpu_custom_call.1} parent=11 // pred_check
          %p214 = pneg %p89
        $region14: #{tpu_custom_call.1} parent=11 // pred_check_branch
          %216 = sbr.rel (%p214) target = $region16
        $region15: #{tpu_custom_call.1} parent=11 // pred_region
          _
        $region16: #{tpu_custom_call.1} parent=11 // pred_fallthru
          _
        // Predicated region
        $region17: #{tpu_custom_call.1} parent=11 // pred_check
          %p217 = pneg %p110
        $region18: #{tpu_custom_call.1} parent=11 // pred_check_branch
          %219 = sbr.rel (%p217) target = $region20
        $region19: #{tpu_custom_call.1} parent=11 // pred_region
          _
        $region20: #{tpu_custom_call.1} parent=11 // pred_fallthru
          _
        // Predicated region
        $region21: #{tpu_custom_call.1} parent=11 // pred_check
          %p220 = pneg %p131
        $region22: #{tpu_custom_call.1} parent=11 // pred_check_branch
          %222 = sbr.rel (%p220) target = $region24
        $region23: #{tpu_custom_call.1} parent=11 // pred_region
          _
        $region24: #{tpu_custom_call.1} parent=11 // pred_fallthru
          _
        // Predicated region
        $region25: #{tpu_custom_call.1} parent=11 // pred_check
          %p223 = pneg %p152
        $region26: #{tpu_custom_call.1} parent=11 // pred_check_branch
          %225 = sbr.rel (%p223) target = $region28
        $region27: #{tpu_custom_call.1} parent=11 // pred_region
          _
        $region28: #{tpu_custom_call.1} parent=11 // pred_fallthru
          _
        // Predicated region
        $region29: #{tpu_custom_call.1} parent=11 // pred_check
          %p226 = pneg %p173
        $region30: #{tpu_custom_call.1} parent=11 // pred_check_branch
          %228 = sbr.rel (%p226) target = $region32
        $region31: #{tpu_custom_call.1} parent=11 // pred_region
          _
        $region32: #{tpu_custom_call.1} parent=11 // pred_fallthru
          _
      $region12: #{tpu_custom_call.1} parent=5 // pred_fallthru
        _
      %p229 = scmp.lt.s32.totalorder %s16, 2
      // Predicated region
      $region33: #{tpu_custom_call.1} parent=5 // pred_check
        %p230 = pneg %p229
      $region34: #{tpu_custom_call.1} parent=5 // pred_check_branch
        %232 = sbr.rel (%p230) target = $region36
      $region35: #{tpu_custom_call.1} parent=5 // pred_region
        // Predicated region
        $region37: #{tpu_custom_call.1} parent=35 // pred_check
          %p233 = pneg %p36
        $region38: #{tpu_custom_call.1} parent=35 // pred_check_branch
          %235 = sbr.rel (%p233) target = $region40
        $region39: #{tpu_custom_call.1} parent=35 // pred_region
          %p236 = scmp.lt.s32.totalorder %s16, 1
          %s237 = scalar_select %p236, %s16, 1
          %s238 = smul.addr %s237, 8
          %s239 = scalar_lea.vmem %s0, %s238
        $region40: #{tpu_custom_call.1} parent=35 // pred_fallthru
          _
        // Predicated region
        $region41: #{tpu_custom_call.1} parent=35 // pred_check
          %p240 = pneg %p62
        $region42: #{tpu_custom_call.1} parent=35 // pred_check_branch
          %242 = sbr.rel (%p240) target = $region44
        $region43: #{tpu_custom_call.1} parent=35 // pred_region
          %p243 = scmp.lt.s32.totalorder %s16, 1
          %s244 = scalar_select %p243, %s16, 1
          %s245 = scalar_lea.vmem %s1, %s244
        $region44: #{tpu_custom_call.1} parent=35 // pred_fallthru
          _
      $region36: #{tpu_custom_call.1} parent=5 // pred_fallthru
        _
      %p246 = scmp.le.s32.totalorder 1, %s16
      %p247 = scmp.lt.s32.totalorder %s16, 3
      %p248 = pnand %p246, %p247
      %p249 = pneg %p248
      // Predicated region
      $region45: #{tpu_custom_call.1} parent=5 // pred_check
        _
      $region46: #{tpu_custom_call.1} parent=5 // pred_check_branch
        %251 = sbr.rel (%p248) target = $region48
      $region47: #{tpu_custom_call.1} parent=5 // pred_region
        %s252 = ssub.s32 %s16, 1
        %p253 = scmp.lt.s32.totalorder %s21, 1
        %s254 = scalar_select %p253, %s21, 1
        %s255 = smul.addr %s254, 8
        %s256 = scalar_lea.vmem %s0, %s255
        %p257 = pneg %p42
        %p258 = pneg %p39
        %p259 = scmp.lt.s32.totalorder %s21, 1
        %s260 = scalar_select %p259, %s21, 1
        %s261 = scalar_lea.vmem %s1, %s260
        %p262 = pneg %p68
        %p263 = pneg %p65
        %p264 = pneg %p89
        %p265 = pneg %p86
        %p266 = pneg %p110
        %p267 = pneg %p107
        %p268 = pneg %p131
        %p269 = pneg %p128
        %p270 = pneg %p152
        %p271 = pneg %p149
        %p272 = pneg %p173
        %p273 = pneg %p170
        %p274 = pneg %p199
        %p275 = pneg %p196
        %s276 = sand.u32 %s186, 1
        %s277 = scalar_lea.sflag [#allocation4], %s276
        %s278 = sand.u32 %s186, 1
        %s279 = smul.addr %s278, 8
        %s280 = scalar_lea.vmem [#allocation3], %s279
        %p281 = scmp.lt.s32.totalorder %s21, 1
        %s282 = scalar_select %p281, %s21, 1
        %s283 = smul.addr %s282, 8
        %s284 = scalar_lea.vmem %s0, %s283
        %p285 = scmp.lt.s32.totalorder %s21, 1
        %s286 = scalar_select %p285, %s21, 1
        %s287 = scalar_lea.vmem %s1, %s286
        %v289 = vld [vmem:[%s284] sm:$0xff]
        %290 = vadd.xlane.f32.xlu0 %v289
        %v291 = vpop.xlane.xlu0 %290
        %v292 = vmul.f32 %v291, 0.03125
        %v293 = vmul.f32 %v289, %v289
        %294 = vadd.xlane.f32.xlu0 %v293
        %v295 = vpop.xlane.xlu0 %294
        %v296 = vmul.f32 %v295, 0.03125
        %v297 = vmul.f32 %v292, %v292
        %v298 = vsub.f32 %v296, %v297
        %v299 = vsub.f32 %v289, %v292
        %v300 = vadd.f32 %v298, 1e-05
        %v301 = vrsqrt.pop %v300
        %v302 = vmul.f32 %v301, %v300
        %v303 = vmul.f32 %v302, %v301
        %v304 = vmul.f32 0.5, %v303
        %v305 = vsub.f32 1.5, %v304
        %v306 = vmul.f32 %v301, %v305
        %vm307 = vweird.f32 %v300
        %vm308 = vweird.f32 %v301
        %vm309 = vmor %vm307, %vm308
        %v310 = vsel %vm309, %v301, %v306
        %v311 = vmul.f32 %v299, %v310
        %v312 = vld [vmem:[%s2] sm:$0x1]
        %v314 = vperm.slane %v312, 0
        %v316 = vmul.f32 %v311, %v314
        %v317 = vld [vmem:[%s3] sm:$0x1]
        %v319 = vperm.slane %v317, 0
        %v321 = vadd.f32 %v316, %v319
        %v322 = vpack.c.bf16 %v321, %v321
        %v323 = vld [vmem:[%s287] sm:$0x1]
        %324 = vst [vmem:[#allocation2] sm:$0xff] 0.0
        %v325 = vld [vmem:[%s4] sm:$0xf]
        %v326 = vld [vmem:[%s4 + $0x4] sm:$0xf]
        %v327 = vld [vmem:[%s4 + $0x8] sm:$0xf]
        %v328 = vld [vmem:[%s4 + $0xc] sm:$0xf]
        %v329 = vld [vmem:[%s4 + $0x10] sm:$0xf]
        %v330 = vld [vmem:[%s4 + $0x14] sm:$0xf]
        %v331 = vld [vmem:[%s4 + $0x18] sm:$0xf]
        %v332 = vld [vmem:[%s4 + $0x1c] sm:$0xf]
        %v333 = vld [vmem:[%s4 + $0x20] sm:$0xf]
        %v334 = vld [vmem:[%s4 + $0x24] sm:$0xf]
        %v335 = vld [vmem:[%s4 + $0x28] sm:$0xf]
        %v336 = vld [vmem:[%s4 + $0x2c] sm:$0xf]
        %v337 = vld [vmem:[%s4 + $0x30] sm:$0xf]
        %v338 = vld [vmem:[%s4 + $0x34] sm:$0xf]
        %v339 = vld [vmem:[%s4 + $0x38] sm:$0xf]
        %v340 = vld [vmem:[%s4 + $0x3c] sm:$0xf]
        %v357 = vunpack.c.l.b16 %v325
        %v358 = vunpack.c.l.b16 %v326
        %v359 = vunpack.c.l.b16 %v327
        %v360 = vunpack.c.l.b16 %v328
        %v361 = vunpack.c.l.b16 %v329
        %v362 = vunpack.c.l.b16 %v330
        %v363 = vunpack.c.l.b16 %v331
        %v364 = vunpack.c.l.b16 %v332
        %v365 = vunpack.c.l.b16 %v333
        %v366 = vunpack.c.l.b16 %v334
        %v367 = vunpack.c.l.b16 %v335
        %v368 = vunpack.c.l.b16 %v336
        %v369 = vunpack.c.l.b16 %v337
        %v370 = vunpack.c.l.b16 %v338
        %v371 = vunpack.c.l.b16 %v339
        %v372 = vunpack.c.l.b16 %v340
        %v373 = vpack.c.b16 %v358, %v357
        %v374 = vpack.c.b16 %v360, %v359
        %v375 = vpack.c.b16 %v362, %v361
        %v376 = vpack.c.b16 %v364, %v363
        %v377 = vpack.c.b16 %v366, %v365
        %v378 = vpack.c.b16 %v368, %v367
        %v379 = vpack.c.b16 %v370, %v369
        %v380 = vpack.c.b16 %v372, %v371
        %389 = vmatpush.bf16.msra.mxu0 %v380
        %390 = vmatpush.bf16.msra.mxu0 %v379
        %391 = vmatpush.bf16.msra.mxu0 %v378
        %392 = vmatpush.bf16.msra.mxu0 %v377
        %393 = vmatpush.bf16.msra.mxu0 %v376
        %394 = vmatpush.bf16.msra.mxu0 %v375
        %395 = vmatpush.bf16.msra.mxu0 %v374
        %396 = vmatpush.bf16.msra.mxu0 %v373
        %397 = vmatmul.bf16.gmra.mxu0 %v322
        %v398 = vpop.f32.mrf.mxu0
        %v399 = vadd.f32 0.0, %v398
        %v400 = vpop.f32.mrf.mxu0
        %401 = vdwg.mxu0
        %v402 = vpack.c.bf16 %v399, %v399
        %v404 = vperm.slane %v323, 0
        %v407 = vunpack.c.l.b16 %v402
        %v408 = vpack.c.b16 %v407, %v407
        %409 = vrot.lane.b32.xlu0 %v408, 112
        %v410 = vpop.permute.xlu0 %409
        %vm411 = vcmask 130048
        %v413 = vsel %vm411, %v402, 0
        %v416 = vsel %vm411, %v410, 0
        %418 = vmatpush.bf16.xpose.msra.mxu0 0
        %419 = vmatpush.bf16.xpose.msra.mxu0 0
        %420 = vmatpush.bf16.xpose.msra.mxu0 0
        %421 = vmatpush.bf16.xpose.msra.mxu0 0
        %422 = vmatpush.bf16.xpose.msra.mxu0 0
        %423 = vmatpush.bf16.xpose.msra.mxu0 0
        %424 = vmatpush.bf16.xpose.msra.mxu0 0
        %425 = vmatpush.bf16.xpose.msra.mxu0 %v416
        %426 = vmatmul.bf16.gmra.mxu0 %v413
        %v427 = vpop.f32.mrf.mxu0
        %v428 = vadd.f32 %v404, %v427
        %v429 = vpop.f32.mrf.mxu0
        %430 = vdwg.mxu0
        %vm431 = vcmask 64512
        %v432 = vsel %vm431, %v428, -inf
        %433 = vmax.xlane.f32.xlu0 %v432
        %v434 = vpop.xlane.xlu0 %433
        %v435 = vsub.f32 %v428, %v434
        %v436 = vmul.f32 %v435, 1.442695
        %v437 = vpow.pop %v436
        %v438 = vsel %vm431, %v437, 0.0
        %439 = vadd.xlane.f32.xlu0 %v438
        %v440 = vpop.xlane.xlu0 %439
        %v441 = vpack.c.bf16 %v437, %v437
        %442 = vrot.lane.b32.xlu0 %v408, 96
        %v443 = vpop.permute.xlu0 %442
        %v445 = vsel %vm431, %v441, 0
        %vm447 = vcmask 1043456
        %v449 = vsel %vm447, %v443, 0
        %451 = vmatpush.bf16.msra.mxu0 0
        %452 = vmatpush.bf16.msra.mxu0 0
        %453 = vmatpush.bf16.msra.mxu0 0
        %454 = vmatpush.bf16.msra.mxu0 0
        %455 = vmatpush.bf16.msra.mxu0 0
        %456 = vmatpush.bf16.msra.mxu0 0
        %457 = vmatpush.bf16.msra.mxu0 0
        %458 = vmatpush.bf16.msra.mxu0 %v449
        %459 = vmatmul.bf16.gmra.mxu0 %v445
        %v460 = vpop.f32.mrf.mxu0
        %v461 = vadd.f32 0.0, %v460
        %v462 = vpop.f32.mrf.mxu0
        %463 = vdwg.mxu0
        %v464 = vrcp.pop %v440
        %v465 = vmul.f32 %v461, %v464
        %v466 = vld [vmem:[#allocation2] sm:$0xff]
        %v467 = vpack.c.bf16 %v465, %v465
        %v468 = vld [vmem:[%s5] sm:$0xf]
        %v469 = vld [vmem:[%s5 + $0x4] sm:$0xf]
        %v472 = vunpack.c.l.b16 %v468
        %v473 = vunpack.c.l.b16 %v469
        %v474 = vpack.c.b16 %v473, %v472
        %v477 = vsel %vm411, %v467, 0
        %479 = vmatpush.bf16.msra.mxu0 0
        %480 = vmatpush.bf16.msra.mxu0 0
        %481 = vmatpush.bf16.msra.mxu0 0
        %482 = vmatpush.bf16.msra.mxu0 0
        %483 = vmatpush.bf16.msra.mxu0 0
        %484 = vmatpush.bf16.msra.mxu0 0
        %485 = vmatpush.bf16.msra.mxu0 0
        %486 = vmatpush.bf16.msra.mxu0 %v474
        %487 = vmatmul.bf16.gmra.mxu0 %v477
        %v488 = vpop.f32.mrf.mxu0
        %v489 = vadd.f32 0.0, %v488
        %v490 = vpop.f32.mrf.mxu0
        %491 = vdwg.mxu0
        %v492 = vadd.f32 %v466, %v489
        %493 = vst [vmem:[#allocation2] sm:$0xff] %v492
        %s494 = scalar_lea.vmem %s4, 64
        %v495 = vld [vmem:[%s494] sm:$0xf]
        %v496 = vld [vmem:[%s494 + $0x4] sm:$0xf]
        %v497 = vld [vmem:[%s494 + $0x8] sm:$0xf]
        %v498 = vld [vmem:[%s494 + $0xc] sm:$0xf]
        %v499 = vld [vmem:[%s494 + $0x10] sm:$0xf]
        %v500 = vld [vmem:[%s494 + $0x14] sm:$0xf]
        %v501 = vld [vmem:[%s494 + $0x18] sm:$0xf]
        %v502 = vld [vmem:[%s494 + $0x1c] sm:$0xf]
        %v503 = vld [vmem:[%s494 + $0x20] sm:$0xf]
        %v504 = vld [vmem:[%s494 + $0x24] sm:$0xf]
        %v505 = vld [vmem:[%s494 + $0x28] sm:$0xf]
        %v506 = vld [vmem:[%s494 + $0x2c] sm:$0xf]
        %v507 = vld [vmem:[%s494 + $0x30] sm:$0xf]
        %v508 = vld [vmem:[%s494 + $0x34] sm:$0xf]
        %v509 = vld [vmem:[%s494 + $0x38] sm:$0xf]
        %v510 = vld [vmem:[%s494 + $0x3c] sm:$0xf]
        %v527 = vunpack.c.l.b16 %v495
        %v528 = vunpack.c.l.b16 %v496
        %v529 = vunpack.c.l.b16 %v497
        %v530 = vunpack.c.l.b16 %v498
        %v531 = vunpack.c.l.b16 %v499
        %v532 = vunpack.c.l.b16 %v500
        %v533 = vunpack.c.l.b16 %v501
        %v534 = vunpack.c.l.b16 %v502
        %v535 = vunpack.c.l.b16 %v503
        %v536 = vunpack.c.l.b16 %v504
        %v537 = vunpack.c.l.b16 %v505
        %v538 = vunpack.c.l.b16 %v506
        %v539 = vunpack.c.l.b16 %v507
        %v540 = vunpack.c.l.b16 %v508
        %v541 = vunpack.c.l.b16 %v509
        %v542 = vunpack.c.l.b16 %v510
        %v543 = vpack.c.b16 %v528, %v527
        %v544 = vpack.c.b16 %v530, %v529
        %v545 = vpack.c.b16 %v532, %v531
        %v546 = vpack.c.b16 %v534, %v533
        %v547 = vpack.c.b16 %v536, %v535
        %v548 = vpack.c.b16 %v538, %v537
        %v549 = vpack.c.b16 %v540, %v539
        %v550 = vpack.c.b16 %v542, %v541
        %559 = vmatpush.bf16.msra.mxu0 %v550
        %560 = vmatpush.bf16.msra.mxu0 %v549
        %561 = vmatpush.bf16.msra.mxu0 %v548
        %562 = vmatpush.bf16.msra.mxu0 %v547
        %563 = vmatpush.bf16.msra.mxu0 %v546
        %564 = vmatpush.bf16.msra.mxu0 %v545
        %565 = vmatpush.bf16.msra.mxu0 %v544
        %566 = vmatpush.bf16.msra.mxu0 %v543
        %567 = vmatmul.bf16.gmra.mxu0 %v322
        %v568 = vpop.f32.mrf.mxu0
        %v569 = vadd.f32 0.0, %v568
        %v570 = vpop.f32.mrf.mxu0
        %571 = vdwg.mxu0
        %v572 = vpack.c.bf16 %v569, %v569
        %v574 = vunpack.c.l.b16 %v572
        %v575 = vpack.c.b16 %v574, %v574
        %576 = vrot.lane.b32.xlu0 %v575, 112
        %v577 = vpop.permute.xlu0 %576
        %v579 = vsel %vm411, %v572, 0
        %v582 = vsel %vm411, %v577, 0
        %584 = vmatpush.bf16.xpose.msra.mxu0 0
        %585 = vmatpush.bf16.xpose.msra.mxu0 0
        %586 = vmatpush.bf16.xpose.msra.mxu0 0
        %587 = vmatpush.bf16.xpose.msra.mxu0 0
        %588 = vmatpush.bf16.xpose.msra.mxu0 0
        %589 = vmatpush.bf16.xpose.msra.mxu0 0
        %590 = vmatpush.bf16.xpose.msra.mxu0 0
        %591 = vmatpush.bf16.xpose.msra.mxu0 %v582
        %592 = vmatmul.bf16.gmra.mxu0 %v579
        %v593 = vpop.f32.mrf.mxu0
        %v594 = vadd.f32 %v404, %v593
        %v595 = vpop.f32.mrf.mxu0
        %596 = vdwg.mxu0
        %v597 = vsel %vm431, %v594, -inf
        %598 = vmax.xlane.f32.xlu0 %v597
        %v599 = vpop.xlane.xlu0 %598
        %v600 = vsub.f32 %v594, %v599
        %v601 = vmul.f32 %v600, 1.442695
        %v602 = vpow.pop %v601
        %v603 = vsel %vm431, %v602, 0.0
        %604 = vadd.xlane.f32.xlu0 %v603
        %v605 = vpop.xlane.xlu0 %604
        %v606 = vpack.c.bf16 %v602, %v602
        %607 = vrot.lane.b32.xlu0 %v575, 96
        %v608 = vpop.permute.xlu0 %607
        %v610 = vsel %vm431, %v606, 0
        %v613 = vsel %vm447, %v608, 0
        %615 = vmatpush.bf16.msra.mxu0 0
        %616 = vmatpush.bf16.msra.mxu0 0
        %617 = vmatpush.bf16.msra.mxu0 0
        %618 = vmatpush.bf16.msra.mxu0 0
        %619 = vmatpush.bf16.msra.mxu0 0
        %620 = vmatpush.bf16.msra.mxu0 0
        %621 = vmatpush.bf16.msra.mxu0 0
        %622 = vmatpush.bf16.msra.mxu0 %v613
        %623 = vmatmul.bf16.gmra.mxu0 %v610
        %v624 = vpop.f32.mrf.mxu0
        %v625 = vadd.f32 0.0, %v624
        %v626 = vpop.f32.mrf.mxu0
        %627 = vdwg.mxu0
        %v628 = vrcp.pop %v605
        %v629 = vmul.f32 %v625, %v628
        %v630 = vld [vmem:[#allocation2] sm:$0xff]
        %v631 = vpack.c.bf16 %v629, %v629
        %s632 = scalar_lea.vmem %s5, 8
        %v633 = vld [vmem:[%s632] sm:$0xf]
        %v634 = vld [vmem:[%s632 + $0x4] sm:$0xf]
        %v637 = vunpack.c.l.b16 %v633
        %v638 = vunpack.c.l.b16 %v634
        %v639 = vpack.c.b16 %v638, %v637
        %v642 = vsel %vm411, %v631, 0
        %644 = vmatpush.bf16.msra.mxu0 0
        %645 = vmatpush.bf16.msra.mxu0 0
        %646 = vmatpush.bf16.msra.mxu0 0
        %647 = vmatpush.bf16.msra.mxu0 0
        %648 = vmatpush.bf16.msra.mxu0 0
        %649 = vmatpush.bf16.msra.mxu0 0
        %650 = vmatpush.bf16.msra.mxu0 0
        %651 = vmatpush.bf16.msra.mxu0 %v639
        %652 = vmatmul.bf16.gmra.mxu0 %v642
        %v653 = vpop.f32.mrf.mxu0
        %v654 = vadd.f32 0.0, %v653
        %v655 = vpop.f32.mrf.mxu0
        %656 = vdwg.mxu0
        %v657 = vadd.f32 %v630, %v654
        %658 = vst [vmem:[#allocation2] sm:$0xff] %v657
        %s659 = scalar_lea.vmem %s4, 128
        %v660 = vld [vmem:[%s659] sm:$0xf]
        %v661 = vld [vmem:[%s659 + $0x4] sm:$0xf]
        %v662 = vld [vmem:[%s659 + $0x8] sm:$0xf]
        %v663 = vld [vmem:[%s659 + $0xc] sm:$0xf]
        %v664 = vld [vmem:[%s659 + $0x10] sm:$0xf]
        %v665 = vld [vmem:[%s659 + $0x14] sm:$0xf]
        %v666 = vld [vmem:[%s659 + $0x18] sm:$0xf]
        %v667 = vld [vmem:[%s659 + $0x1c] sm:$0xf]
        %v668 = vld [vmem:[%s659 + $0x20] sm:$0xf]
        %v669 = vld [vmem:[%s659 + $0x24] sm:$0xf]
        %v670 = vld [vmem:[%s659 + $0x28] sm:$0xf]
        %v671 = vld [vmem:[%s659 + $0x2c] sm:$0xf]
        %v672 = vld [vmem:[%s659 + $0x30] sm:$0xf]
        %v673 = vld [vmem:[%s659 + $0x34] sm:$0xf]
        %v674 = vld [vmem:[%s659 + $0x38] sm:$0xf]
        %v675 = vld [vmem:[%s659 + $0x3c] sm:$0xf]
        %v692 = vunpack.c.l.b16 %v660
        %v693 = vunpack.c.l.b16 %v661
        %v694 = vunpack.c.l.b16 %v662
        %v695 = vunpack.c.l.b16 %v663
        %v696 = vunpack.c.l.b16 %v664
        %v697 = vunpack.c.l.b16 %v665
        %v698 = vunpack.c.l.b16 %v666
        %v699 = vunpack.c.l.b16 %v667
        %v700 = vunpack.c.l.b16 %v668
        %v701 = vunpack.c.l.b16 %v669
        %v702 = vunpack.c.l.b16 %v670
        %v703 = vunpack.c.l.b16 %v671
        %v704 = vunpack.c.l.b16 %v672
        %v705 = vunpack.c.l.b16 %v673
        %v706 = vunpack.c.l.b16 %v674
        %v707 = vunpack.c.l.b16 %v675
        %v708 = vpack.c.b16 %v693, %v692
        %v709 = vpack.c.b16 %v695, %v694
        %v710 = vpack.c.b16 %v697, %v696
        %v711 = vpack.c.b16 %v699, %v698
        %v712 = vpack.c.b16 %v701, %v700
        %v713 = vpack.c.b16 %v703, %v702
        %v714 = vpack.c.b16 %v705, %v704
        %v715 = vpack.c.b16 %v707, %v706
        %724 = vmatpush.bf16.msra.mxu0 %v715
        %725 = vmatpush.bf16.msra.mxu0 %v714
        %726 = vmatpush.bf16.msra.mxu0 %v713
        %727 = vmatpush.bf16.msra.mxu0 %v712
        %728 = vmatpush.bf16.msra.mxu0 %v711
        %729 = vmatpush.bf16.msra.mxu0 %v710
        %730 = vmatpush.bf16.msra.mxu0 %v709
        %731 = vmatpush.bf16.msra.mxu0 %v708
        %732 = vmatmul.bf16.gmra.mxu0 %v322
        %v733 = vpop.f32.mrf.mxu0
        %v734 = vadd.f32 0.0, %v733
        %v735 = vpop.f32.mrf.mxu0
        %736 = vdwg.mxu0
        %v737 = vpack.c.bf16 %v734, %v734
        %v739 = vunpack.c.l.b16 %v737
        %v740 = vpack.c.b16 %v739, %v739
        %741 = vrot.lane.b32.xlu0 %v740, 112
        %v742 = vpop.permute.xlu0 %741
        %v744 = vsel %vm411, %v737, 0
        %v747 = vsel %vm411, %v742, 0
        %749 = vmatpush.bf16.xpose.msra.mxu0 0
        %750 = vmatpush.bf16.xpose.msra.mxu0 0
        %751 = vmatpush.bf16.xpose.msra.mxu0 0
        %752 = vmatpush.bf16.xpose.msra.mxu0 0
        %753 = vmatpush.bf16.xpose.msra.mxu0 0
        %754 = vmatpush.bf16.xpose.msra.mxu0 0
        %755 = vmatpush.bf16.xpose.msra.mxu0 0
        %756 = vmatpush.bf16.xpose.msra.mxu0 %v747
        %757 = vmatmul.bf16.gmra.mxu0 %v744
        %v758 = vpop.f32.mrf.mxu0
        %v759 = vadd.f32 %v404, %v758
        %v760 = vpop.f32.mrf.mxu0
        %761 = vdwg.mxu0
        %v762 = vsel %vm431, %v759, -inf
        %763 = vmax.xlane.f32.xlu0 %v762
        %v764 = vpop.xlane.xlu0 %763
        %v765 = vsub.f32 %v759, %v764
        %v766 = vmul.f32 %v765, 1.442695
        %v767 = vpow.pop %v766
        %v768 = vsel %vm431, %v767, 0.0
        %769 = vadd.xlane.f32.xlu0 %v768
        %v770 = vpop.xlane.xlu0 %769
        %v771 = vpack.c.bf16 %v767, %v767
        %772 = vrot.lane.b32.xlu0 %v740, 96
        %v773 = vpop.permute.xlu0 %772
        %v775 = vsel %vm431, %v771, 0
        %v778 = vsel %vm447, %v773, 0
        %780 = vmatpush.bf16.msra.mxu0 0
        %781 = vmatpush.bf16.msra.mxu0 0
        %782 = vmatpush.bf16.msra.mxu0 0
        %783 = vmatpush.bf16.msra.mxu0 0
        %784 = vmatpush.bf16.msra.mxu0 0
        %785 = vmatpush.bf16.msra.mxu0 0
        %786 = vmatpush.bf16.msra.mxu0 0
        %787 = vmatpush.bf16.msra.mxu0 %v778
        %788 = vmatmul.bf16.gmra.mxu0 %v775
        %v789 = vpop.f32.mrf.mxu0
        %v790 = vadd.f32 0.0, %v789
        %v791 = vpop.f32.mrf.mxu0
        %792 = vdwg.mxu0
        %v793 = vrcp.pop %v770
        %v794 = vmul.f32 %v790, %v793
        %v795 = vld [vmem:[#allocation2] sm:$0xff]
        %v796 = vpack.c.bf16 %v794, %v794
        %s797 = scalar_lea.vmem %s5, 16
        %v798 = vld [vmem:[%s797] sm:$0xf]
        %v799 = vld [vmem:[%s797 + $0x4] sm:$0xf]
        %v802 = vunpack.c.l.b16 %v798
        %v803 = vunpack.c.l.b16 %v799
        %v804 = vpack.c.b16 %v803, %v802
        %v807 = vsel %vm411, %v796, 0
        %809 = vmatpush.bf16.msra.mxu0 0
        %810 = vmatpush.bf16.msra.mxu0 0
        %811 = vmatpush.bf16.msra.mxu0 0
        %812 = vmatpush.bf16.msra.mxu0 0
        %813 = vmatpush.bf16.msra.mxu0 0
        %814 = vmatpush.bf16.msra.mxu0 0
        %815 = vmatpush.bf16.msra.mxu0 0
        %816 = vmatpush.bf16.msra.mxu0 %v804
        %817 = vmatmul.bf16.gmra.mxu0 %v807
        %v818 = vpop.f32.mrf.mxu0
        %v819 = vadd.f32 0.0, %v818
        %v820 = vpop.f32.mrf.mxu0
        %821 = vdwg.mxu0
        %v822 = vadd.f32 %v795, %v819
        %823 = vst [vmem:[#allocation2] sm:$0xff] %v822
        %s824 = scalar_lea.vmem %s4, 192
        %v825 = vld [vmem:[%s824] sm:$0xf]
        %v826 = vld [vmem:[%s824 + $0x4] sm:$0xf]
        %v827 = vld [vmem:[%s824 + $0x8] sm:$0xf]
        %v828 = vld [vmem:[%s824 + $0xc] sm:$0xf]
        %v829 = vld [vmem:[%s824 + $0x10] sm:$0xf]
        %v830 = vld [vmem:[%s824 + $0x14] sm:$0xf]
        %v831 = vld [vmem:[%s824 + $0x18] sm:$0xf]
        %v832 = vld [vmem:[%s824 + $0x1c] sm:$0xf]
        %v833 = vld [vmem:[%s824 + $0x20] sm:$0xf]
        %v834 = vld [vmem:[%s824 + $0x24] sm:$0xf]
        %v835 = vld [vmem:[%s824 + $0x28] sm:$0xf]
        %v836 = vld [vmem:[%s824 + $0x2c] sm:$0xf]
        %v837 = vld [vmem:[%s824 + $0x30] sm:$0xf]
        %v838 = vld [vmem:[%s824 + $0x34] sm:$0xf]
        %v839 = vld [vmem:[%s824 + $0x38] sm:$0xf]
        %v840 = vld [vmem:[%s824 + $0x3c] sm:$0xf]
        %v857 = vunpack.c.l.b16 %v825
        %v858 = vunpack.c.l.b16 %v826
        %v859 = vunpack.c.l.b16 %v827
        %v860 = vunpack.c.l.b16 %v828
        %v861 = vunpack.c.l.b16 %v829
        %v862 = vunpack.c.l.b16 %v830
        %v863 = vunpack.c.l.b16 %v831
        %v864 = vunpack.c.l.b16 %v832
        %v865 = vunpack.c.l.b16 %v833
        %v866 = vunpack.c.l.b16 %v834
        %v867 = vunpack.c.l.b16 %v835
        %v868 = vunpack.c.l.b16 %v836
        %v869 = vunpack.c.l.b16 %v837
        %v870 = vunpack.c.l.b16 %v838
        %v871 = vunpack.c.l.b16 %v839
        %v872 = vunpack.c.l.b16 %v840
        %v873 = vpack.c.b16 %v858, %v857
        %v874 = vpack.c.b16 %v860, %v859
        %v875 = vpack.c.b16 %v862, %v861
        %v876 = vpack.c.b16 %v864, %v863
        %v877 = vpack.c.b16 %v866, %v865
        %v878 = vpack.c.b16 %v868, %v867
        %v879 = vpack.c.b16 %v870, %v869
        %v880 = vpack.c.b16 %v872, %v871
        %889 = vmatpush.bf16.msra.mxu0 %v880
        %890 = vmatpush.bf16.msra.mxu0 %v879
        %891 = vmatpush.bf16.msra.mxu0 %v878
        %892 = vmatpush.bf16.msra.mxu0 %v877
        %893 = vmatpush.bf16.msra.mxu0 %v876
        %894 = vmatpush.bf16.msra.mxu0 %v875
        %895 = vmatpush.bf16.msra.mxu0 %v874
        %896 = vmatpush.bf16.msra.mxu0 %v873
        %897 = vmatmul.bf16.gmra.mxu0 %v322
        %v898 = vpop.f32.mrf.mxu0
        %v899 = vadd.f32 0.0, %v898
        %v900 = vpop.f32.mrf.mxu0
        %901 = vdwg.mxu0
        %v902 = vpack.c.bf16 %v899, %v899
        %v904 = vunpack.c.l.b16 %v902
        %v905 = vpack.c.b16 %v904, %v904
        %906 = vrot.lane.b32.xlu0 %v905, 112
        %v907 = vpop.permute.xlu0 %906
        %v909 = vsel %vm411, %v902, 0
        %v912 = vsel %vm411, %v907, 0
        %914 = vmatpush.bf16.xpose.msra.mxu0 0
        %915 = vmatpush.bf16.xpose.msra.mxu0 0
        %916 = vmatpush.bf16.xpose.msra.mxu0 0
        %917 = vmatpush.bf16.xpose.msra.mxu0 0
        %918 = vmatpush.bf16.xpose.msra.mxu0 0
        %919 = vmatpush.bf16.xpose.msra.mxu0 0
        %920 = vmatpush.bf16.xpose.msra.mxu0 0
        %921 = vmatpush.bf16.xpose.msra.mxu0 %v912
        %922 = vmatmul.bf16.gmra.mxu0 %v909
        %v923 = vpop.f32.mrf.mxu0
        %v924 = vadd.f32 %v404, %v923
        %v925 = vpop.f32.mrf.mxu0
        %926 = vdwg.mxu0
        %v927 = vsel %vm431, %v924, -inf
        %928 = vmax.xlane.f32.xlu0 %v927
        %v929 = vpop.xlane.xlu0 %928
        %v930 = vsub.f32 %v924, %v929
        %v931 = vmul.f32 %v930, 1.442695
        %v932 = vpow.pop %v931
        %v933 = vsel %vm431, %v932, 0.0
        %934 = vadd.xlane.f32.xlu0 %v933
        %v935 = vpop.xlane.xlu0 %934
        %v936 = vpack.c.bf16 %v932, %v932
        %937 = vrot.lane.b32.xlu0 %v905, 96
        %v938 = vpop.permute.xlu0 %937
        %v940 = vsel %vm431, %v936, 0
        %v943 = vsel %vm447, %v938, 0
        %945 = vmatpush.bf16.msra.mxu0 0
        %946 = vmatpush.bf16.msra.mxu0 0
        %947 = vmatpush.bf16.msra.mxu0 0
        %948 = vmatpush.bf16.msra.mxu0 0
        %949 = vmatpush.bf16.msra.mxu0 0
        %950 = vmatpush.bf16.msra.mxu0 0
        %951 = vmatpush.bf16.msra.mxu0 0
        %952 = vmatpush.bf16.msra.mxu0 %v943
        %953 = vmatmul.bf16.gmra.mxu0 %v940
        %v954 = vpop.f32.mrf.mxu0
        %v955 = vadd.f32 0.0, %v954
        %v956 = vpop.f32.mrf.mxu0
        %957 = vdwg.mxu0
        %v958 = vrcp.pop %v935
        %v959 = vmul.f32 %v955, %v958
        %v960 = vld [vmem:[#allocation2] sm:$0xff]
        %v961 = vpack.c.bf16 %v959, %v959
        %s962 = scalar_lea.vmem %s5, 24
        %v963 = vld [vmem:[%s962] sm:$0xf]
        %v964 = vld [vmem:[%s962 + $0x4] sm:$0xf]
        %v967 = vunpack.c.l.b16 %v963
        %v968 = vunpack.c.l.b16 %v964
        %v969 = vpack.c.b16 %v968, %v967
        %v972 = vsel %vm411, %v961, 0
        %974 = vmatpush.bf16.msra.mxu0 0
        %975 = vmatpush.bf16.msra.mxu0 0
        %976 = vmatpush.bf16.msra.mxu0 0
        %977 = vmatpush.bf16.msra.mxu0 0
        %978 = vmatpush.bf16.msra.mxu0 0
        %979 = vmatpush.bf16.msra.mxu0 0
        %980 = vmatpush.bf16.msra.mxu0 0
        %981 = vmatpush.bf16.msra.mxu0 %v969
        %982 = vmatmul.bf16.gmra.mxu0 %v972
        %v983 = vpop.f32.mrf.mxu0
        %v984 = vadd.f32 0.0, %v983
        %v985 = vpop.f32.mrf.mxu0
        %986 = vdwg.mxu0
        %v987 = vadd.f32 %v960, %v984
        %988 = vst [vmem:[#allocation2] sm:$0xff] %v987
        %v989 = vld [vmem:[#allocation2] sm:$0xff]
        %v990 = vld [vmem:[%s6] sm:$0x1]
        %v992 = vperm.slane %v990, 0
        %v994 = vadd.f32 %v989, %v992
        %995 = vst [vmem:[%s280] sm:$0xff] %v994
        %s996 = sand.u32 %s186, 1
        %s997 = scalar_lea.sflag [#allocation4], %s996
        %s998 = sand.u32 %s186, 1
        %s999 = smul.addr %s998, 8
        %s1000 = scalar_lea.vmem [#allocation3], %s999
        // Predicated region
        $region49: #{tpu_custom_call.1} parent=47 // pred_check
          %p1001 = pneg %p196
        $region50: #{tpu_custom_call.1} parent=47 // pred_check_branch
          %1003 = sbr.rel (%p1001) target = $region52
        $region51: #{tpu_custom_call.1} parent=47 // pred_region
          %1005 = vsyncadd %s997, 0
          %s1006 = smul.addr %s21, 8
          %s1007 = scalar_lea.hbm %s7, %s1006
          %s1009 = sshll.u32 %s1000, 4
          %s1010 = int_to_ptr.vmem [resolvable:$true] %s1009
          %s1011 = sshll.u32 %s1007, 4
          %s1012 = int_to_ptr.hbm [resolvable:$true] %s1011
          %1014 = dma.vmem_to_hbm [thread:$0]  %s1010, 128, %s1012, %s997
        $region52: #{tpu_custom_call.1} parent=47 // pred_fallthru
          _
      $region48: #{tpu_custom_call.1} parent=5 // pred_fallthru
        _
      %p1015 = scmp.le.s32.totalorder 2, %s16
      // Predicated region
      $region53: #{tpu_custom_call.1} parent=5 // pred_check
        %p1016 = pneg %p1015
      $region54: #{tpu_custom_call.1} parent=5 // pred_check_branch
        %1018 = sbr.rel (%p1016) target = $region56
      $region55: #{tpu_custom_call.1} parent=5 // pred_region
        %s1019 = ssub.s32 %s16, 2
        // Predicated region
        $region57: #{tpu_custom_call.1} parent=55 // pred_check
          %p1020 = pneg %p202
        $region58: #{tpu_custom_call.1} parent=55 // pred_check_branch
          %1022 = sbr.rel (%p1020) target = $region60
        $region59: #{tpu_custom_call.1} parent=55 // pred_region
          %s1023 = sand.u32 %s187, 1
          %s1024 = scalar_lea.sflag [#allocation4], %s1023
          %s1025 = sand.u32 %s187, 1
          %s1026 = smul.addr %s1025, 8
          %s1027 = scalar_lea.vmem [#allocation3], %s1026
          %1029 = dma.done %s1024, 128
        $region60: #{tpu_custom_call.1} parent=55 // pred_fallthru
          _
      $region56: #{tpu_custom_call.1} parent=5 // pred_fallthru
        _
    $region6: #{tpu_custom_call.1} parent=1 // loop_footer
      %s20 = sadd.s32 1, %s16
    $region7: #{tpu_custom_call.1} parent=1 // loop_footer_branch
      %15 = sbr.rel target = $region3
    $region8: #{tpu_custom_call.1} parent=1 // loop_exit
      _
    %1030 = vsyncpa [#allocation4], 1
    %s1031 = scalar_lea.sflag [#allocation4], 1
    %1032 = vsyncpa %s1031, 1

</llo_original>
